<compile_context>
chip_gen: v7x
topology: tpu7x:2x2x1
jax: 0.10.0
libtpu: 0.0.40
codegen_flags: <defaults>
</compile_context>

<pallas_src>
import functools

import jax
import jax.numpy as jnp
from jax.experimental import pallas as pl
from jax.experimental.pallas import tpu as pltpu


def qconcat_kernel(zqs_ref, xhat_ref, wz_ref, wx_ref, b_ref, o_ref):
    zqs = zqs_ref[...]           # native dtype (bf16/f32) -> MXU directly
    xhat = xhat_ref[...]
    # Linear over the (virtually) concatenated features = two MXU matmuls
    # with f32 accumulation.
    acc = jnp.dot(zqs, wz_ref[...], preferred_element_type=jnp.float32)
    acc = acc + jnp.dot(xhat, wx_ref[...], preferred_element_type=jnp.float32)
    acc = acc + b_ref[...]                      # (1, E) f32, broadcasts over rows
    o_ref[...] = (zqs.astype(jnp.float32) + acc).astype(o_ref.dtype)


def prepare_qconcat_params(weight, bias):
    """One-time (model-init) parameter prep.

    weight: torch Linear layout (E, E+D); bias: (E,).
    Returns Wz (E, E), Wx (D, E), bias2d (1, E) f32.  Hoisted out of the
    per-call path so the transpose/split is not re-materialized on every
    forward step (e.g. inside the QINCo per-codebook loop).
    """
    E = weight.shape[0]
    w_t = jnp.asarray(weight).T                 # (E + D, E)
    wz = w_t[:E, :]                             # (E, E)   -- multiplies zqs
    wx = w_t[E:, :]                             # (D, E)   -- multiplies xhat
    b2 = jnp.asarray(bias, jnp.float32).reshape(1, E)
    return wz, wx, b2


@functools.partial(jax.jit, static_argnames=("block_b",))
def qconcat(zqs, xhat, wz, wx, b2, *, block_b=512):
    """zqs: (B, E), xhat: (B, D), wz: (E, E), wx: (D, E), b2: (1, E) f32."""
    B, E = zqs.shape
    D = xhat.shape[-1]
    assert wz.shape == (E, E) and wx.shape == (D, E) and b2.shape == (1, E)

    # Row tile: full batch if small, otherwise an 8-aligned tile so the grid
    # has multiple steps to pipeline / shard across TensorCores.
    block_b = min(block_b, B)
    if block_b < B:
        block_b = max(8, (block_b // 8) * 8)
    grid_b = pl.cdiv(B, block_b)

    # Explicit VMEM budget: double-buffered activation/output tiles plus the
    # (default double-buffered) resident weights, with headroom.  Kept well
    # under v7x's 64 MiB physical VMEM for any sane block_b.
    act_bytes = 2 * block_b * (E + D) * zqs.dtype.itemsize
    out_bytes = 2 * block_b * E * zqs.dtype.itemsize
    w_bytes = 2 * ((E * E + D * E) * wz.dtype.itemsize + E * 4)
    vmem_limit = min(int(1.5 * (act_bytes + out_bytes + w_bytes)) + (4 << 20),
                     64 << 20)

    return pl.pallas_call(
        qconcat_kernel,
        out_shape=jax.ShapeDtypeStruct((B, E), zqs.dtype),
        grid_spec=pltpu.PrefetchScalarGridSpec(
            num_scalar_prefetch=0,
            grid=(grid_b,),
            in_specs=[
                pl.BlockSpec((block_b, E), lambda i: (i, 0)),   # zqs tile (streamed)
                pl.BlockSpec((block_b, D), lambda i: (i, 0)),   # xhat tile (streamed)
                # Wz/Wx/bias are grid-invariant (constant index_map) so they are
                # DMA'd once and stay resident.  For very large E on v7x,
                # pipeline_mode=pl.Buffered(1) on these specs would halve their
                # VMEM; at these sizes default buffering is fine.
                pl.BlockSpec((E, E), lambda i: (0, 0)),         # Wz (resident)
                pl.BlockSpec((D, E), lambda i: (0, 0)),         # Wx (resident)
                pl.BlockSpec((1, E), lambda i: (0, 0)),         # bias (resident)
            ],
            out_specs=pl.BlockSpec((block_b, E), lambda i: (i, 0)),
        ),
        compiler_params=pltpu.CompilerParams(
            dimension_semantics=("parallel",),
            vmem_limit_bytes=vmem_limit,
        ),
    )(zqs, xhat, wz, wx, b2)


if __name__ == "__main__":
    # Lane-dense, pipeline-exercising shapes: E and D are multiples of 128
    # (full-lane vreg columns, unmasked stores), batch big enough for several
    # parallel grid steps, still only a few MB total.
    B, E, D = 2048, 256, 128
    key = jax.random.PRNGKey(0)
    k1, k2, k3, k4 = jax.random.split(key, 4)

    dtype = jnp.bfloat16
    zqs = jax.random.normal(k1, (B, E), dtype=jnp.float32).astype(dtype)
    xhat = jax.random.normal(k2, (B, D), dtype=jnp.float32).astype(dtype)

    # Deterministic synthetic parameters in torch Linear layout (out, in).
    # (The module zero-inits when cfg.qinco1_mode is False; small nonzero
    # values here so the matmul path is actually exercised.)
    weight = (0.05 * jax.random.normal(k3, (E, E + D), dtype=jnp.float32)).astype(dtype)
    bias = 0.01 * jax.random.normal(k4, (E,), dtype=jnp.float32)

    # One-time parameter prep (model init), not per-call.
    wz, wx, b2 = prepare_qconcat_params(weight, bias)

    out = qconcat(zqs, xhat, wz, wx, b2, block_b=512)
    out = jax.block_until_ready(out)

    # Reference in plain JAX f32 (mirrors the PyTorch forward exactly).
    zq32 = zqs.astype(jnp.float32)
    xh32 = xhat.astype(jnp.float32)
    w32 = weight.astype(jnp.float32)
    cc = jnp.concatenate([zq32, xh32], axis=-1)
    ref = zq32 + cc @ w32.T + bias

    assert jnp.allclose(out.astype(jnp.float32), ref, atol=5e-2, rtol=5e-2), \
        "mismatch vs reference"

    print("KERNEL_OK")
</pallas_src>

<mosaic_0001>
module attributes {stable_mosaic.version = 11 : i64} {
  func.func @qconcat_kernel(%arg0: i32, %arg1: memref<512x256xbf16, #tpu.memory_space<vmem>>, %arg2: memref<512x128xbf16, #tpu.memory_space<vmem>>, %arg3: memref<256x256xbf16, #tpu.memory_space<vmem>>, %arg4: memref<128x256xbf16, #tpu.memory_space<vmem>>, %arg5: memref<1x256xf32, #tpu.memory_space<vmem>>, %arg6: memref<512x256xbf16, #tpu.memory_space<vmem>>) attributes {dimension_semantics = [#tpu.dimension_semantics<parallel>], iteration_bounds = array<i64: 4>, scalar_prefetch = 0 : i64, scratch_operands = 0 : i64, tpu.core_type = #tpu.core_type<tc>, window_params = [{transform_indices = @transform_0, window_bounds = array<i64: 512, 256>}, {transform_indices = @transform_1, window_bounds = array<i64: 512, 128>}, {pipeline_mode = #tpu.pipeline_mode<synchronous>, transform_indices = @transform_2, window_bounds = array<i64: 256, 256>}, {pipeline_mode = #tpu.pipeline_mode<synchronous>, transform_indices = @transform_3, window_bounds = array<i64: 128, 256>}, {pipeline_mode = #tpu.pipeline_mode<synchronous>, transform_indices = @transform_4, window_bounds = array<i64: 1, 256>}, {transform_indices = @transform_5, window_bounds = array<i64: 512, 256>}]} {
    %c0 = arith.constant 0 : index
    %c0_0 = arith.constant 0 : index
    %0 = vector.load %arg1[%c0, %c0_0] : memref<512x256xbf16, #tpu.memory_space<vmem>>, vector<512x256xbf16>
    %c0_1 = arith.constant 0 : index
    %c0_2 = arith.constant 0 : index
    %1 = vector.load %arg2[%c0_1, %c0_2] : memref<512x128xbf16, #tpu.memory_space<vmem>>, vector<512x128xbf16>
    %c0_3 = arith.constant 0 : index
    %c0_4 = arith.constant 0 : index
    %2 = vector.load %arg3[%c0_3, %c0_4] : memref<256x256xbf16, #tpu.memory_space<vmem>>, vector<256x256xbf16>
    %cst = arith.constant dense<0.000000e+00> : vector<512x256xf32>
    %3 = tpu.matmul %0, %2, %cst {dimension_numbers = #tpu.dot_dimension_numbers<[1], [0], [0], [1], [0, 0, 1, 1], [], []>} : vector<512x256xbf16>, vector<256x256xbf16>, vector<512x256xf32> -> vector<512x256xf32>
    %c0_5 = arith.constant 0 : index
    %c0_6 = arith.constant 0 : index
    %4 = vector.load %arg4[%c0_5, %c0_6] : memref<128x256xbf16, #tpu.memory_space<vmem>>, vector<128x256xbf16>
    %cst_7 = arith.constant dense<0.000000e+00> : vector<512x256xf32>
    %5 = tpu.matmul %1, %4, %cst_7 {dimension_numbers = #tpu.dot_dimension_numbers<[1], [0], [0], [1], [0, 0, 1, 1], [], []>} : vector<512x128xbf16>, vector<128x256xbf16>, vector<512x256xf32> -> vector<512x256xf32>
    %6 = arith.addf %3, %5 : vector<512x256xf32>
    %c0_8 = arith.constant 0 : index
    %c0_9 = arith.constant 0 : index
    %7 = vector.load %arg5[%c0_8, %c0_9] : memref<1x256xf32, #tpu.memory_space<vmem>>, vector<1x256xf32>
    %8 = vector.broadcast %7 : vector<1x256xf32> to vector<512x256xf32>
    %9 = arith.addf %6, %8 : vector<512x256xf32>
    %10 = arith.extf %0 : vector<512x256xbf16> to vector<512x256xf32>
    %11 = arith.addf %10, %9 : vector<512x256xf32>
    %12 = arith.truncf %11 : vector<512x256xf32> to vector<512x256xbf16>
    %c0_10 = arith.constant 0 : index
    %c0_11 = arith.constant 0 : index
    %13 = vector.load %arg6[%c0_10, %c0_11] : memref<512x256xbf16, #tpu.memory_space<vmem>>, vector<512x256xbf16>
    tpu.vector_store %arg6[%c0_10, %c0_11], %12 {strides = array<i32>} : memref<512x256xbf16, #tpu.memory_space<vmem>>, vector<512x256xbf16>,
    return
  }
  func.func @transform_0(%arg0: i32) -> (i32, i32) {
    %c0_i32 = arith.constant 0 : i32
    %c0_i32_0 = arith.constant 0 : i32
    return %arg0, %c0_i32 : i32, i32
  }
  func.func @transform_1(%arg0: i32) -> (i32, i32) {
    %c0_i32 = arith.constant 0 : i32
    %c0_i32_0 = arith.constant 0 : i32
    return %arg0, %c0_i32 : i32, i32
  }
  func.func @transform_2(%arg0: i32) -> (i32, i32) {
    %c0_i32 = arith.constant 0 : i32
    %c0_i32_0 = arith.constant 0 : i32
    %c0_i32_1 = arith.constant 0 : i32
    return %c0_i32, %c0_i32_0 : i32, i32
  }
  func.func @transform_3(%arg0: i32) -> (i32, i32) {
    %c0_i32 = arith.constant 0 : i32
    %c0_i32_0 = arith.constant 0 : i32
    %c0_i32_1 = arith.constant 0 : i32
    return %c0_i32, %c0_i32_0 : i32, i32
  }
  func.func @transform_4(%arg0: i32) -> (i32, i32) {
    %c0_i32 = arith.constant 0 : i32
    %c0_i32_0 = arith.constant 0 : i32
    %c0_i32_1 = arith.constant 0 : i32
    return %c0_i32, %c0_i32_0 : i32, i32
  }
  func.func @transform_5(%arg0: i32) -> (i32, i32) {
    %c0_i32 = arith.constant 0 : i32
    %c0_i32_0 = arith.constant 0 : i32
    return %arg0, %c0_i32 : i32, i32
  }
}

</mosaic_0001>

<llo_original>
// kernel: qconcat.1
$region0: #{qconcat.1}
  #allocation0 [shape = 'u32[]', space=smem, size = 0x4, offset = 0x4, fixed_abs, tag = 'smem constant byte address 0x4 - core index']
  #allocation1 [shape = 'u32[144,128]{1,0:T(1,128)}', space=vmem, size = 0x12000, scoped, tag = 'internal scratch']
  %s0 = inlined_call_operand.hbm [shape: bf16[2048,256], index: 0, kind: input, shape index: {}]
  %s1 = inlined_call_operand.hbm [shape: bf16[2048,128], index: 1, kind: input, shape index: {}]
  %s2 = inlined_call_operand.hbm [shape: bf16[256,256], index: 2, kind: input, shape index: {}]
  %s3 = inlined_call_operand.hbm [shape: bf16[128,256], index: 3, kind: input, shape index: {}]
  %s4 = inlined_call_operand.vmem [shape: f32[1,256], index: 4, kind: input, shape index: {}]
  %s5 = inlined_call_operand.hbm [shape: bf16[2048,256], index: 5, kind: output, shape index: {}]
  %s6 = sld [smem:[#allocation0]]
  $region69: #{qconcat.1} parent=0
    _
  %s8 = ssub.s32 1, %s6
  %s9 = scalar_select 0, %s8, %s6
  $region1: #{qconcat.1} parent=0
    #allocation2 [shape = 'u8[524288]{0}', space=vmem, size = 0x80000, scoped, tag = 'input window, operand 0']
    #allocation3 [shape = 's32[2]{0}', space=sflag, size = 0x8, scoped, tag = 'scoped memory for qconcat.1']
    #allocation4 [shape = 's32[2]{0}', space=sflag, size = 0x8, scoped, tag = 'scoped memory for qconcat.1']
    #allocation5 [shape = 'u8[262144]{0}', space=vmem, size = 0x40000, scoped, tag = 'input window, operand 1']
    #allocation6 [shape = 's32[2]{0}', space=sflag, size = 0x8, scoped, tag = 'scoped memory for qconcat.1']
    #allocation7 [shape = 'u8[131072]{0}', space=vmem, size = 0x20000, scoped, tag = 'input window, operand 2, single buffered']
    #allocation8 [shape = 'u8[65536]{0}', space=vmem, size = 0x10000, scoped, tag = 'input window, operand 3, single buffered']
    #allocation9 [shape = 's32[1]{0}', space=sflag, size = 0x4, scoped, tag = 'scoped memory for qconcat.1']
    #allocation10 [shape = 'u8[524288]{0}', space=vmem, size = 0x80000, scoped, tag = 'output window, operand 0']
    %10 = vsyncpa [#allocation3], 0
    %s11 = scalar_lea.sflag [#allocation3], 1
    %12 = vsyncpa %s11, 0
    %13 = vsyncpa [#allocation6], 0
    %s14 = scalar_lea.sflag [#allocation6], 1
    %15 = vsyncpa %s14, 0
    %16 = vsyncpa [#allocation9], 0
    %17 = vsyncpa [#allocation4], 0
    %s18 = scalar_lea.sflag [#allocation4], 1
    %19 = vsyncpa %s18, 0
    loop: start=0, step=1, limit=6
    $region2: #{qconcat.1} parent=1 // loop_pre_header
      _
    $region3: #{qconcat.1} parent=1 // loop_header
      %s21 = sphi 0, %s25
      %p22 = scmp.ge.s32.totalorder %s21, 6
      %s31 = sphi 0, %s33
      %s34 = sphi 0, %s31
      %s35 = sphi 0, %s34
      %s51 = sphi 0, %s35
      %s57 = sphi 0, %s59
      %s60 = sphi 0, %s57
      %s61 = sphi 0, %s60
      %s77 = sphi 0, %s61
      %s81 = sphi 0, %s81
      %s83 = sphi 0, %s81
      %s84 = sphi 0, %s83
      %s98 = sphi 0, %s84
      %s102 = sphi 0, %s102
      %s104 = sphi 0, %s102
      %s105 = sphi 0, %s104
      %s119 = sphi 0, %s105
      %s123 = sphi 0, %s123
      %s125 = sphi 0, %s123
      %s126 = sphi 0, %s125
      %s140 = sphi 0, %s126
      %s146 = sphi 0, %s148
      %s149 = sphi 0, %s146
      %s150 = sphi 0, %s149
      %s166 = sphi 0, %s150
    $region4: #{qconcat.1} parent=1 // loop_header_branch
      %24 = sbr.rel (%p22) target = $region8
    $region5: #{qconcat.1} parent=1 // loop_body
      %s26 = ssub.s32 %s21, 1
      %s27 = ssub.s32 %s21, 2
      %s28 = sadd.s32 %s21, 1
      %s29 = ssub.s32 %s21, %s28
      %p30 = scmp.eq.s32.totalorder %s29, 0
      %s32 = sadd.s32 %s31, 1
      %s33 = scalar_select %p30, %s31, %s32
      %p36 = pneg %p30
      %p37 = scmp.eq.s32.totalorder %s21, 3
      %p38 = por %p36, %p37
      %p39 = scmp.ne.s32.totalorder %s31, %s34
      %p40 = scmp.eq.s32.totalorder %s21, 0
      %p41 = por %p39, %p40
      %p42 = scmp.ne.s32.totalorder %s31, %s34
      %p43 = scmp.eq.s32.totalorder %s26, 3
      %p44 = por %p42, %p43
      %p45 = scmp.ne.s32.totalorder %s34, %s35
      %p46 = scmp.eq.s32.totalorder %s26, 0
      %p47 = por %p45, %p46
      %p48 = scmp.ne.s32.totalorder %s34, %s35
      %p49 = scmp.eq.s32.totalorder %s27, 3
      %p50 = por %p48, %p49
      %p52 = scmp.ne.s32.totalorder %s35, %s51
      %p53 = scmp.eq.s32.totalorder %s27, 0
      %p54 = por %p52, %p53
      %s55 = ssub.s32 %s21, %s28
      %p56 = scmp.eq.s32.totalorder %s55, 0
      %s58 = sadd.s32 %s57, 1
      %s59 = scalar_select %p56, %s57, %s58
      %p62 = pneg %p56
      %p63 = scmp.eq.s32.totalorder %s21, 3
      %p64 = por %p62, %p63
      %p65 = scmp.ne.s32.totalorder %s57, %s60
      %p66 = scmp.eq.s32.totalorder %s21, 0
      %p67 = por %p65, %p66
      %p68 = scmp.ne.s32.totalorder %s57, %s60
      %p69 = scmp.eq.s32.totalorder %s26, 3
      %p70 = por %p68, %p69
      %p71 = scmp.ne.s32.totalorder %s60, %s61
      %p72 = scmp.eq.s32.totalorder %s26, 0
      %p73 = por %p71, %p72
      %p74 = scmp.ne.s32.totalorder %s60, %s61
      %p75 = scmp.eq.s32.totalorder %s27, 3
      %p76 = por %p74, %p75
      %p78 = scmp.ne.s32.totalorder %s61, %s77
      %p79 = scmp.eq.s32.totalorder %s27, 0
      %p80 = por %p78, %p79
      %s82 = sadd.s32 %s81, 1
      %p85 = scmp.eq.s32.totalorder %s21, 3
      %p86 = scmp.ne.s32.totalorder %s81, %s83
      %p87 = scmp.eq.s32.totalorder %s21, 0
      %p88 = por %p86, %p87
      %p89 = scmp.ne.s32.totalorder %s81, %s83
      %p90 = scmp.eq.s32.totalorder %s26, 3
      %p91 = por %p89, %p90
      %p92 = scmp.ne.s32.totalorder %s83, %s84
      %p93 = scmp.eq.s32.totalorder %s26, 0
      %p94 = por %p92, %p93
      %p95 = scmp.ne.s32.totalorder %s83, %s84
      %p96 = scmp.eq.s32.totalorder %s27, 3
      %p97 = por %p95, %p96
      %p99 = scmp.ne.s32.totalorder %s84, %s98
      %p100 = scmp.eq.s32.totalorder %s27, 0
      %p101 = por %p99, %p100
      %s103 = sadd.s32 %s102, 1
      %p106 = scmp.eq.s32.totalorder %s21, 3
      %p107 = scmp.ne.s32.totalorder %s102, %s104
      %p108 = scmp.eq.s32.totalorder %s21, 0
      %p109 = por %p107, %p108
      %p110 = scmp.ne.s32.totalorder %s102, %s104
      %p111 = scmp.eq.s32.totalorder %s26, 3
      %p112 = por %p110, %p111
      %p113 = scmp.ne.s32.totalorder %s104, %s105
      %p114 = scmp.eq.s32.totalorder %s26, 0
      %p115 = por %p113, %p114
      %p116 = scmp.ne.s32.totalorder %s104, %s105
      %p117 = scmp.eq.s32.totalorder %s27, 3
      %p118 = por %p116, %p117
      %p120 = scmp.ne.s32.totalorder %s105, %s119
      %p121 = scmp.eq.s32.totalorder %s27, 0
      %p122 = por %p120, %p121
      %s124 = sadd.s32 %s123, 1
      %p127 = scmp.eq.s32.totalorder %s21, 3
      %p128 = scmp.ne.s32.totalorder %s123, %s125
      %p129 = scmp.eq.s32.totalorder %s21, 0
      %p130 = por %p128, %p129
      %p131 = scmp.ne.s32.totalorder %s123, %s125
      %p132 = scmp.eq.s32.totalorder %s26, 3
      %p133 = por %p131, %p132
      %p134 = scmp.ne.s32.totalorder %s125, %s126
      %p135 = scmp.eq.s32.totalorder %s26, 0
      %p136 = por %p134, %p135
      %p137 = scmp.ne.s32.totalorder %s125, %s126
      %p138 = scmp.eq.s32.totalorder %s27, 3
      %p139 = por %p137, %p138
      %p141 = scmp.ne.s32.totalorder %s126, %s140
      %p142 = scmp.eq.s32.totalorder %s27, 0
      %p143 = por %p141, %p142
      %s144 = ssub.s32 %s21, %s28
      %p145 = scmp.eq.s32.totalorder %s144, 0
      %s147 = sadd.s32 %s146, 1
      %s148 = scalar_select %p145, %s146, %s147
      %p151 = pneg %p145
      %p152 = scmp.eq.s32.totalorder %s21, 3
      %p153 = por %p151, %p152
      %p154 = scmp.ne.s32.totalorder %s146, %s149
      %p155 = scmp.eq.s32.totalorder %s21, 0
      %p156 = por %p154, %p155
      %p157 = scmp.ne.s32.totalorder %s146, %s149
      %p158 = scmp.eq.s32.totalorder %s26, 3
      %p159 = por %p157, %p158
      %p160 = scmp.ne.s32.totalorder %s149, %s150
      %p161 = scmp.eq.s32.totalorder %s26, 0
      %p162 = por %p160, %p161
      %p163 = scmp.ne.s32.totalorder %s149, %s150
      %p164 = scmp.eq.s32.totalorder %s27, 3
      %p165 = por %p163, %p164
      %p167 = scmp.ne.s32.totalorder %s150, %s166
      %p168 = scmp.eq.s32.totalorder %s27, 0
      %p169 = por %p167, %p168
      %p170 = scmp.le.s32.totalorder 1, %s21
      %p171 = scmp.lt.s32.totalorder %s21, 5
      %p172 = pnand %p170, %p171
      %p173 = pneg %p172
      // Predicated region
      $region9: #{qconcat.1} parent=5 // pred_check
        _
      $region10: #{qconcat.1} parent=5 // pred_check_branch
        %175 = sbr.rel (%p172) target = $region12
      $region11: #{qconcat.1} parent=5 // pred_region
        %s176 = ssub.s32 %s21, 1
        // Predicated region
        $region13: #{qconcat.1} parent=11 // pred_check
          %p177 = pneg %p94
        $region14: #{qconcat.1} parent=11 // pred_check_branch
          %179 = sbr.rel (%p177) target = $region16
        $region15: #{qconcat.1} parent=11 // pred_region
          %s181 = ssub.s32 4096, 4096
          %182 = vsyncadd [#allocation6], %s181
          %s183 = sshll.u32 [#allocation7], 4
          %s184 = int_to_ptr.vmem [resolvable:$true] %s183
          %189 = dma.hbm_to_vmem [thread:$0]  %s2, 4096, %s184, [#allocation6], 128, 128, 8
        $region16: #{qconcat.1} parent=11 // pred_fallthru
          _
        // Predicated region
        $region17: #{qconcat.1} parent=11 // pred_check
          %p190 = pneg %p115
        $region18: #{qconcat.1} parent=11 // pred_check_branch
          %192 = sbr.rel (%p190) target = $region20
        $region19: #{qconcat.1} parent=11 // pred_region
          %s194 = ssub.s32 2048, 2048
          %195 = vsyncadd [#allocation9], %s194
          %s196 = sshll.u32 [#allocation8], 4
          %s197 = int_to_ptr.vmem [resolvable:$true] %s196
          %202 = dma.hbm_to_vmem [thread:$0]  %s3, 2048, %s197, [#allocation9], 128, 128, 8
        $region20: #{qconcat.1} parent=11 // pred_fallthru
          _
        // Predicated region
        $region21: #{qconcat.1} parent=11 // pred_check
          %p203 = pneg %p136
        $region22: #{qconcat.1} parent=11 // pred_check_branch
          %205 = sbr.rel (%p203) target = $region24
        $region23: #{qconcat.1} parent=11 // pred_region
          _
        $region24: #{qconcat.1} parent=11 // pred_fallthru
          _
      $region12: #{qconcat.1} parent=5 // pred_fallthru
        _
      %p206 = scmp.lt.s32.totalorder %s21, 4
      // Predicated region
      $region25: #{qconcat.1} parent=5 // pred_check
        %p207 = pneg %p206
      $region26: #{qconcat.1} parent=5 // pred_check_branch
        %209 = sbr.rel (%p207) target = $region28
      $region27: #{qconcat.1} parent=5 // pred_region
        // Predicated region
        $region29: #{qconcat.1} parent=27 // pred_check
          %p210 = pneg %p41
        $region30: #{qconcat.1} parent=27 // pred_check_branch
          %212 = sbr.rel (%p210) target = $region32
        $region31: #{qconcat.1} parent=27 // pred_region
          %s213 = sand.u32 %s31, 1
          %s214 = scalar_lea.sflag [#allocation3], %s213
          %s215 = sand.u32 %s31, 1
          %s216 = smul.addr %s215, 512
          %s217 = scalar_lea.vmem [#allocation2], %s216
          %s218 = smul.u32 64, %s21
          %s220 = ssub.s32 8192, 8192
          %221 = vsyncadd %s214, %s220
          %s222 = smul.addr %s218, 2
          %s223 = smul.addr %s222, 64
          %s224 = scalar_lea.hbm %s0, %s223
          %s225 = sshll.u32 %s217, 4
          %s226 = int_to_ptr.vmem [resolvable:$true] %s225
          %231 = dma.hbm_to_vmem [thread:$0]  %s224, 8192, %s226, %s214, 128, 128, 8
        $region32: #{qconcat.1} parent=27 // pred_fallthru
          _
        // Predicated region
        $region33: #{qconcat.1} parent=27 // pred_check
          %p232 = pneg %p67
        $region34: #{qconcat.1} parent=27 // pred_check_branch
          %234 = sbr.rel (%p232) target = $region36
        $region35: #{qconcat.1} parent=27 // pred_region
          %s235 = sand.u32 %s21, 1
          %s236 = scalar_lea.sflag [#allocation6], %s235
          %s237 = sand.u32 %s57, 1
          %s238 = smul.addr %s237, 256
          %s239 = scalar_lea.vmem [#allocation5], %s238
          %s240 = smul.u32 64, %s21
          %s242 = ssub.s32 4096, 4096
          %243 = vsyncadd %s236, %s242
          %s244 = smul.addr %s240, 64
          %s245 = scalar_lea.hbm %s1, %s244
          %s246 = sshll.u32 %s239, 4
          %s247 = int_to_ptr.vmem [resolvable:$true] %s246
          %252 = dma.hbm_to_vmem [thread:$0]  %s245, 4096, %s247, %s236, 64, 64, 4
        $region36: #{qconcat.1} parent=27 // pred_fallthru
          _
      $region28: #{qconcat.1} parent=5 // pred_fallthru
        _
      %p253 = scmp.le.s32.totalorder 1, %s21
      %p254 = scmp.lt.s32.totalorder %s21, 5
      %p255 = pnand %p253, %p254
      %p256 = pneg %p255
      // Predicated region
      $region37: #{qconcat.1} parent=5 // pred_check
        _
      $region38: #{qconcat.1} parent=5 // pred_check_branch
        %258 = sbr.rel (%p255) target = $region40
      $region39: #{qconcat.1} parent=5 // pred_region
        %s259 = ssub.s32 %s21, 1
        %s260 = sand.u32 %s34, 1
        %s261 = scalar_lea.sflag [#allocation3], %s260
        %s262 = sand.u32 %s34, 1
        %s263 = smul.addr %s262, 512
        %s264 = scalar_lea.vmem [#allocation2], %s263
        // Predicated region
        $region41: #{qconcat.1} parent=39 // pred_check
          %p265 = pneg %p47
        $region42: #{qconcat.1} parent=39 // pred_check_branch
          %267 = sbr.rel (%p265) target = $region44
        $region43: #{qconcat.1} parent=39 // pred_region
          %268 = dma.done %s261, 8192
        $region44: #{qconcat.1} parent=39 // pred_fallthru
          _
        %s269 = sand.u32 %s26, 1
        %s270 = scalar_lea.sflag [#allocation6], %s269
        %s271 = sand.u32 %s60, 1
        %s272 = smul.addr %s271, 256
        %s273 = scalar_lea.vmem [#allocation5], %s272
        // Predicated region
        $region45: #{qconcat.1} parent=39 // pred_check
          %p274 = pneg %p73
        $region46: #{qconcat.1} parent=39 // pred_check_branch
          %276 = sbr.rel (%p274) target = $region48
        $region47: #{qconcat.1} parent=39 // pred_region
          %277 = dma.done %s270, 4096
        $region48: #{qconcat.1} parent=39 // pred_fallthru
          _
        // Predicated region
        $region49: #{qconcat.1} parent=39 // pred_check
          %p278 = pneg %p94
        $region50: #{qconcat.1} parent=39 // pred_check_branch
          %280 = sbr.rel (%p278) target = $region52
        $region51: #{qconcat.1} parent=39 // pred_region
          %281 = dma.done [#allocation6], 4096
        $region52: #{qconcat.1} parent=39 // pred_fallthru
          _
        // Predicated region
        $region53: #{qconcat.1} parent=39 // pred_check
          %p282 = pneg %p115
        $region54: #{qconcat.1} parent=39 // pred_check_branch
          %284 = sbr.rel (%p282) target = $region56
        $region55: #{qconcat.1} parent=39 // pred_region
          %285 = dma.done [#allocation9], 2048
        $region56: #{qconcat.1} parent=39 // pred_fallthru
          _
        %s286 = sand.u32 %s34, 1
        %s287 = scalar_lea.sflag [#allocation3], %s286
        %s288 = sand.u32 %s34, 1
        %s289 = smul.addr %s288, 512
        %s290 = scalar_lea.vmem [#allocation2], %s289
        %p291 = pneg %p47
        %p292 = pneg %p44
        %s293 = sand.u32 %s26, 1
        %s294 = scalar_lea.sflag [#allocation6], %s293
        %s295 = sand.u32 %s60, 1
        %s296 = smul.addr %s295, 256
        %s297 = scalar_lea.vmem [#allocation5], %s296
        %p298 = pneg %p73
        %p299 = pneg %p70
        %p300 = pneg %p94
        %p301 = pneg %p91
        %p302 = pneg %p115
        %p303 = pneg %p112
        %p304 = pneg %p136
        %p305 = pneg %p133
        %p306 = pneg %p162
        %p307 = pneg %p159
        %s308 = sand.u32 %s149, 1
        %s309 = scalar_lea.sflag [#allocation4], %s308
        %s310 = sand.u32 %s149, 1
        %s311 = smul.addr %s310, 512
        %s312 = scalar_lea.vmem [#allocation10], %s311
        %s313 = smul.u32 64, %s26
        %s314 = smul.u32 64, %s26
        %s315 = smul.u32 64, %s26
        %v317 = vld [vmem:[%s264] sm:$0xff]
        %v318 = vld [vmem:[%s264 + $0x8] sm:$0xff]
        %v319 = vld [vmem:[%s264 + $0x10] sm:$0xff]
        %v320 = vld [vmem:[%s264 + $0x18] sm:$0xff]
        %v321 = vld [vmem:[%s264 + $0x20] sm:$0xff]
        %v322 = vld [vmem:[%s264 + $0x28] sm:$0xff]
        %v323 = vld [vmem:[%s264 + $0x30] sm:$0xff]
        %v324 = vld [vmem:[%s264 + $0x38] sm:$0xff]
        %v325 = vld [vmem:[%s264 + $0x40] sm:$0xff]
        %v326 = vld [vmem:[%s264 + $0x48] sm:$0xff]
        %v327 = vld [vmem:[%s264 + $0x50] sm:$0xff]
        %v328 = vld [vmem:[%s264 + $0x58] sm:$0xff]
        %v329 = vld [vmem:[%s264 + $0x60] sm:$0xff]
        %v330 = vld [vmem:[%s264 + $0x68] sm:$0xff]
        %v331 = vld [vmem:[%s264 + $0x70] sm:$0xff]
        %v332 = vld [vmem:[%s264 + $0x78] sm:$0xff]
        %v333 = vld [vmem:[%s264 + $0x80] sm:$0xff]
        %v334 = vld [vmem:[%s264 + $0x88] sm:$0xff]
        %v335 = vld [vmem:[%s264 + $0x90] sm:$0xff]
        %v336 = vld [vmem:[%s264 + $0x98] sm:$0xff]
        %v337 = vld [vmem:[%s264 + $0xa0] sm:$0xff]
        %v338 = vld [vmem:[%s264 + $0xa8] sm:$0xff]
        %v339 = vld [vmem:[%s264 + $0xb0] sm:$0xff]
        %v340 = vld [vmem:[%s264 + $0xb8] sm:$0xff]
        %v341 = vld [vmem:[%s264 + $0xc0] sm:$0xff]
        %v342 = vld [vmem:[%s264 + $0xc8] sm:$0xff]
        %v343 = vld [vmem:[%s264 + $0xd0] sm:$0xff]
        %v344 = vld [vmem:[%s264 + $0xd8] sm:$0xff]
        %v345 = vld [vmem:[%s264 + $0xe0] sm:$0xff]
        %v346 = vld [vmem:[%s264 + $0xe8] sm:$0xff]
        %v347 = vld [vmem:[%s264 + $0xf0] sm:$0xff]
        %v348 = vld [vmem:[%s264 + $0xf8] sm:$0xff]
        %v349 = vld [vmem:[%s264 + $0x100] sm:$0xff]
        %v350 = vld [vmem:[%s264 + $0x108] sm:$0xff]
        %v351 = vld [vmem:[%s264 + $0x110] sm:$0xff]
        %v352 = vld [vmem:[%s264 + $0x118] sm:$0xff]
        %v353 = vld [vmem:[%s264 + $0x120] sm:$0xff]
        %v354 = vld [vmem:[%s264 + $0x128] sm:$0xff]
        %v355 = vld [vmem:[%s264 + $0x130] sm:$0xff]
        %v356 = vld [vmem:[%s264 + $0x138] sm:$0xff]
        %v357 = vld [vmem:[%s264 + $0x140] sm:$0xff]
        %v358 = vld [vmem:[%s264 + $0x148] sm:$0xff]
        %v359 = vld [vmem:[%s264 + $0x150] sm:$0xff]
        %v360 = vld [vmem:[%s264 + $0x158] sm:$0xff]
        %v361 = vld [vmem:[%s264 + $0x160] sm:$0xff]
        %v362 = vld [vmem:[%s264 + $0x168] sm:$0xff]
        %v363 = vld [vmem:[%s264 + $0x170] sm:$0xff]
        %v364 = vld [vmem:[%s264 + $0x178] sm:$0xff]
        %v365 = vld [vmem:[%s264 + $0x180] sm:$0xff]
        %v366 = vld [vmem:[%s264 + $0x188] sm:$0xff]
        %v367 = vld [vmem:[%s264 + $0x190] sm:$0xff]
        %v368 = vld [vmem:[%s264 + $0x198] sm:$0xff]
        %v369 = vld [vmem:[%s264 + $0x1a0] sm:$0xff]
        %v370 = vld [vmem:[%s264 + $0x1a8] sm:$0xff]
        %v371 = vld [vmem:[%s264 + $0x1b0] sm:$0xff]
        %v372 = vld [vmem:[%s264 + $0x1b8] sm:$0xff]
        %v373 = vld [vmem:[%s264 + $0x1c0] sm:$0xff]
        %v374 = vld [vmem:[%s264 + $0x1c8] sm:$0xff]
        %v375 = vld [vmem:[%s264 + $0x1d0] sm:$0xff]
        %v376 = vld [vmem:[%s264 + $0x1d8] sm:$0xff]
        %v377 = vld [vmem:[%s264 + $0x1e0] sm:$0xff]
        %v378 = vld [vmem:[%s264 + $0x1e8] sm:$0xff]
        %v379 = vld [vmem:[%s264 + $0x1f0] sm:$0xff]
        %v380 = vld [vmem:[%s264 + $0x1f8] sm:$0xff]
        %v381 = vld [vmem:[%s273] sm:$0xf]
        %v382 = vld [vmem:[%s273 + $0x4] sm:$0xf]
        %v383 = vld [vmem:[%s273 + $0x8] sm:$0xf]
        %v384 = vld [vmem:[%s273 + $0xc] sm:$0xf]
        %v385 = vld [vmem:[%s273 + $0x10] sm:$0xf]
        %v386 = vld [vmem:[%s273 + $0x14] sm:$0xf]
        %v387 = vld [vmem:[%s273 + $0x18] sm:$0xf]
        %v388 = vld [vmem:[%s273 + $0x1c] sm:$0xf]
        %v389 = vld [vmem:[%s273 + $0x20] sm:$0xf]
        %v390 = vld [vmem:[%s273 + $0x24] sm:$0xf]
        %v391 = vld [vmem:[%s273 + $0x28] sm:$0xf]
        %v392 = vld [vmem:[%s273 + $0x2c] sm:$0xf]
        %v393 = vld [vmem:[%s273 + $0x30] sm:$0xf]
        %v394 = vld [vmem:[%s273 + $0x34] sm:$0xf]
        %v395 = vld [vmem:[%s273 + $0x38] sm:$0xf]
        %v396 = vld [vmem:[%s273 + $0x3c] sm:$0xf]
        %v397 = vld [vmem:[%s273 + $0x40] sm:$0xf]
        %v398 = vld [vmem:[%s273 + $0x44] sm:$0xf]
        %v399 = vld [vmem:[%s273 + $0x48] sm:$0xf]
        %v400 = vld [vmem:[%s273 + $0x4c] sm:$0xf]
        %v401 = vld [vmem:[%s273 + $0x50] sm:$0xf]
        %v402 = vld [vmem:[%s273 + $0x54] sm:$0xf]
        %v403 = vld [vmem:[%s273 + $0x58] sm:$0xf]
        %v404 = vld [vmem:[%s273 + $0x5c] sm:$0xf]
        %v405 = vld [vmem:[%s273 + $0x60] sm:$0xf]
        %v406 = vld [vmem:[%s273 + $0x64] sm:$0xf]
        %v407 = vld [vmem:[%s273 + $0x68] sm:$0xf]
        %v408 = vld [vmem:[%s273 + $0x6c] sm:$0xf]
        %v409 = vld [vmem:[%s273 + $0x70] sm:$0xf]
        %v410 = vld [vmem:[%s273 + $0x74] sm:$0xf]
        %v411 = vld [vmem:[%s273 + $0x78] sm:$0xf]
        %v412 = vld [vmem:[%s273 + $0x7c] sm:$0xf]
        %v413 = vld [vmem:[%s273 + $0x80] sm:$0xf]
        %v414 = vld [vmem:[%s273 + $0x84] sm:$0xf]
        %v415 = vld [vmem:[%s273 + $0x88] sm:$0xf]
        %v416 = vld [vmem:[%s273 + $0x8c] sm:$0xf]
        %v417 = vld [vmem:[%s273 + $0x90] sm:$0xf]
        %v418 = vld [vmem:[%s273 + $0x94] sm:$0xf]
        %v419 = vld [vmem:[%s273 + $0x98] sm:$0xf]
        %v420 = vld [vmem:[%s273 + $0x9c] sm:$0xf]
        %v421 = vld [vmem:[%s273 + $0xa0] sm:$0xf]
        %v422 = vld [vmem:[%s273 + $0xa4] sm:$0xf]
        %v423 = vld [vmem:[%s273 + $0xa8] sm:$0xf]
        %v424 = vld [vmem:[%s273 + $0xac] sm:$0xf]
        %v425 = vld [vmem:[%s273 + $0xb0] sm:$0xf]
        %v426 = vld [vmem:[%s273 + $0xb4] sm:$0xf]
        %v427 = vld [vmem:[%s273 + $0xb8] sm:$0xf]
        %v428 = vld [vmem:[%s273 + $0xbc] sm:$0xf]
        %v429 = vld [vmem:[%s273 + $0xc0] sm:$0xf]
        %v430 = vld [vmem:[%s273 + $0xc4] sm:$0xf]
        %v431 = vld [vmem:[%s273 + $0xc8] sm:$0xf]
        %v432 = vld [vmem:[%s273 + $0xcc] sm:$0xf]
        %v433 = vld [vmem:[%s273 + $0xd0] sm:$0xf]
        %v434 = vld [vmem:[%s273 + $0xd4] sm:$0xf]
        %v435 = vld [vmem:[%s273 + $0xd8] sm:$0xf]
        %v436 = vld [vmem:[%s273 + $0xdc] sm:$0xf]
        %v437 = vld [vmem:[%s273 + $0xe0] sm:$0xf]
        %v438 = vld [vmem:[%s273 + $0xe4] sm:$0xf]
        %v439 = vld [vmem:[%s273 + $0xe8] sm:$0xf]
        %v440 = vld [vmem:[%s273 + $0xec] sm:$0xf]
        %v441 = vld [vmem:[%s273 + $0xf0] sm:$0xf]
        %v442 = vld [vmem:[%s273 + $0xf4] sm:$0xf]
        %v443 = vld [vmem:[%s273 + $0xf8] sm:$0xf]
        %v444 = vld [vmem:[%s273 + $0xfc] sm:$0xf]
        %v445 = vld [vmem:[#allocation7] sm:$0xff]
        %v446 = vld [vmem:[#allocation7 + $0x8] sm:$0xff]
        %v447 = vld [vmem:[#allocation7 + $0x10] sm:$0xff]
        %v448 = vld [vmem:[#allocation7 + $0x18] sm:$0xff]
        %v449 = vld [vmem:[#allocation7 + $0x20] sm:$0xff]
        %v450 = vld [vmem:[#allocation7 + $0x28] sm:$0xff]
        %v451 = vld [vmem:[#allocation7 + $0x30] sm:$0xff]
        %v452 = vld [vmem:[#allocation7 + $0x38] sm:$0xff]
        %v453 = vld [vmem:[#allocation7 + $0x40] sm:$0xff]
        %v454 = vld [vmem:[#allocation7 + $0x48] sm:$0xff]
        %v455 = vld [vmem:[#allocation7 + $0x50] sm:$0xff]
        %v456 = vld [vmem:[#allocation7 + $0x58] sm:$0xff]
        %v457 = vld [vmem:[#allocation7 + $0x60] sm:$0xff]
        %v458 = vld [vmem:[#allocation7 + $0x68] sm:$0xff]
        %v459 = vld [vmem:[#allocation7 + $0x70] sm:$0xff]
        %v460 = vld [vmem:[#allocation7 + $0x78] sm:$0xff]
        %v461 = vld [vmem:[#allocation7 + $0x80] sm:$0xff]
        %v462 = vld [vmem:[#allocation7 + $0x88] sm:$0xff]
        %v463 = vld [vmem:[#allocation7 + $0x90] sm:$0xff]
        %v464 = vld [vmem:[#allocation7 + $0x98] sm:$0xff]
        %v465 = vld [vmem:[#allocation7 + $0xa0] sm:$0xff]
        %v466 = vld [vmem:[#allocation7 + $0xa8] sm:$0xff]
        %v467 = vld [vmem:[#allocation7 + $0xb0] sm:$0xff]
        %v468 = vld [vmem:[#allocation7 + $0xb8] sm:$0xff]
        %v469 = vld [vmem:[#allocation7 + $0xc0] sm:$0xff]
        %v470 = vld [vmem:[#allocation7 + $0xc8] sm:$0xff]
        %v471 = vld [vmem:[#allocation7 + $0xd0] sm:$0xff]
        %v472 = vld [vmem:[#allocation7 + $0xd8] sm:$0xff]
        %v473 = vld [vmem:[#allocation7 + $0xe0] sm:$0xff]
        %v474 = vld [vmem:[#allocation7 + $0xe8] sm:$0xff]
        %v475 = vld [vmem:[#allocation7 + $0xf0] sm:$0xff]
        %v476 = vld [vmem:[#allocation7 + $0xf8] sm:$0xff]
        %v477 = vld [vmem:[#allocation8] sm:$0xff]
        %v478 = vld [vmem:[#allocation8 + $0x8] sm:$0xff]
        %v479 = vld [vmem:[#allocation8 + $0x10] sm:$0xff]
        %v480 = vld [vmem:[#allocation8 + $0x18] sm:$0xff]
        %v481 = vld [vmem:[#allocation8 + $0x20] sm:$0xff]
        %v482 = vld [vmem:[#allocation8 + $0x28] sm:$0xff]
        %v483 = vld [vmem:[#allocation8 + $0x30] sm:$0xff]
        %v484 = vld [vmem:[#allocation8 + $0x38] sm:$0xff]
        %v485 = vld [vmem:[#allocation8 + $0x40] sm:$0xff]
        %v486 = vld [vmem:[#allocation8 + $0x48] sm:$0xff]
        %v487 = vld [vmem:[#allocation8 + $0x50] sm:$0xff]
        %v488 = vld [vmem:[#allocation8 + $0x58] sm:$0xff]
        %v489 = vld [vmem:[#allocation8 + $0x60] sm:$0xff]
        %v490 = vld [vmem:[#allocation8 + $0x68] sm:$0xff]
        %v491 = vld [vmem:[#allocation8 + $0x70] sm:$0xff]
        %v492 = vld [vmem:[#allocation8 + $0x78] sm:$0xff]
        %v557 = vunpack.c.l.b16 %v381
        %v558 = vunpack.c.l.b16 %v382
        %v559 = vunpack.c.l.b16 %v383
        %v560 = vunpack.c.l.b16 %v384
        %v561 = vunpack.c.l.b16 %v385
        %v562 = vunpack.c.l.b16 %v386
        %v563 = vunpack.c.l.b16 %v387
        %v564 = vunpack.c.l.b16 %v388
        %v565 = vunpack.c.l.b16 %v389
        %v566 = vunpack.c.l.b16 %v390
        %v567 = vunpack.c.l.b16 %v391
        %v568 = vunpack.c.l.b16 %v392
        %v569 = vunpack.c.l.b16 %v393
        %v570 = vunpack.c.l.b16 %v394
        %v571 = vunpack.c.l.b16 %v395
        %v572 = vunpack.c.l.b16 %v396
        %v573 = vunpack.c.l.b16 %v397
        %v574 = vunpack.c.l.b16 %v398
        %v575 = vunpack.c.l.b16 %v399
        %v576 = vunpack.c.l.b16 %v400
        %v577 = vunpack.c.l.b16 %v401
        %v578 = vunpack.c.l.b16 %v402
        %v579 = vunpack.c.l.b16 %v403
        %v580 = vunpack.c.l.b16 %v404
        %v581 = vunpack.c.l.b16 %v405
        %v582 = vunpack.c.l.b16 %v406
        %v583 = vunpack.c.l.b16 %v407
        %v584 = vunpack.c.l.b16 %v408
        %v585 = vunpack.c.l.b16 %v409
        %v586 = vunpack.c.l.b16 %v410
        %v587 = vunpack.c.l.b16 %v411
        %v588 = vunpack.c.l.b16 %v412
        %v589 = vunpack.c.l.b16 %v413
        %v590 = vunpack.c.l.b16 %v414
        %v591 = vunpack.c.l.b16 %v415
        %v592 = vunpack.c.l.b16 %v416
        %v593 = vunpack.c.l.b16 %v417
        %v594 = vunpack.c.l.b16 %v418
        %v595 = vunpack.c.l.b16 %v419
        %v596 = vunpack.c.l.b16 %v420
        %v597 = vunpack.c.l.b16 %v421
        %v598 = vunpack.c.l.b16 %v422
        %v599 = vunpack.c.l.b16 %v423
        %v600 = vunpack.c.l.b16 %v424
        %v601 = vunpack.c.l.b16 %v425
        %v602 = vunpack.c.l.b16 %v426
        %v603 = vunpack.c.l.b16 %v427
        %v604 = vunpack.c.l.b16 %v428
        %v605 = vunpack.c.l.b16 %v429
        %v606 = vunpack.c.l.b16 %v430
        %v607 = vunpack.c.l.b16 %v431
        %v608 = vunpack.c.l.b16 %v432
        %v609 = vunpack.c.l.b16 %v433
        %v610 = vunpack.c.l.b16 %v434
        %v611 = vunpack.c.l.b16 %v435
        %v612 = vunpack.c.l.b16 %v436
        %v613 = vunpack.c.l.b16 %v437
        %v614 = vunpack.c.l.b16 %v438
        %v615 = vunpack.c.l.b16 %v439
        %v616 = vunpack.c.l.b16 %v440
        %v617 = vunpack.c.l.b16 %v441
        %v618 = vunpack.c.l.b16 %v442
        %v619 = vunpack.c.l.b16 %v443
        %v620 = vunpack.c.l.b16 %v444
        %v621 = vpack.c.b16 %v558, %v557
        %v622 = vpack.c.b16 %v560, %v559
        %v623 = vpack.c.b16 %v562, %v561
        %v624 = vpack.c.b16 %v564, %v563
        %v625 = vpack.c.b16 %v566, %v565
        %v626 = vpack.c.b16 %v568, %v567
        %v627 = vpack.c.b16 %v570, %v569
        %v628 = vpack.c.b16 %v572, %v571
        %v629 = vpack.c.b16 %v574, %v573
        %v630 = vpack.c.b16 %v576, %v575
        %v631 = vpack.c.b16 %v578, %v577
        %v632 = vpack.c.b16 %v580, %v579
        %v633 = vpack.c.b16 %v582, %v581
        %v634 = vpack.c.b16 %v584, %v583
        %v635 = vpack.c.b16 %v586, %v585
        %v636 = vpack.c.b16 %v588, %v587
        %v637 = vpack.c.b16 %v590, %v589
        %v638 = vpack.c.b16 %v592, %v591
        %v639 = vpack.c.b16 %v594, %v593
        %v640 = vpack.c.b16 %v596, %v595
        %v641 = vpack.c.b16 %v598, %v597
        %v642 = vpack.c.b16 %v600, %v599
        %v643 = vpack.c.b16 %v602, %v601
        %v644 = vpack.c.b16 %v604, %v603
        %v645 = vpack.c.b16 %v606, %v605
        %v646 = vpack.c.b16 %v608, %v607
        %v647 = vpack.c.b16 %v610, %v609
        %v648 = vpack.c.b16 %v612, %v611
        %v649 = vpack.c.b16 %v614, %v613
        %v650 = vpack.c.b16 %v616, %v615
        %v651 = vpack.c.b16 %v618, %v617
        %v652 = vpack.c.b16 %v620, %v619
        %v701 = vunpack.c.l.b16 %v477
        %v702 = vunpack.c.h.b16 %v477
        %v703 = vunpack.c.l.b16 %v478
        %v704 = vunpack.c.h.b16 %v478
        %v705 = vunpack.c.l.b16 %v479
        %v706 = vunpack.c.h.b16 %v479
        %v707 = vunpack.c.l.b16 %v480
        %v708 = vunpack.c.h.b16 %v480
        %v709 = vunpack.c.l.b16 %v481
        %v710 = vunpack.c.h.b16 %v481
        %v711 = vunpack.c.l.b16 %v482
        %v712 = vunpack.c.h.b16 %v482
        %v713 = vunpack.c.l.b16 %v483
        %v714 = vunpack.c.h.b16 %v483
        %v715 = vunpack.c.l.b16 %v484
        %v716 = vunpack.c.h.b16 %v484
        %v717 = vunpack.c.l.b16 %v485
        %v718 = vunpack.c.h.b16 %v485
        %v719 = vunpack.c.l.b16 %v486
        %v720 = vunpack.c.h.b16 %v486
        %v721 = vunpack.c.l.b16 %v487
        %v722 = vunpack.c.h.b16 %v487
        %v723 = vunpack.c.l.b16 %v488
        %v724 = vunpack.c.h.b16 %v488
        %v725 = vunpack.c.l.b16 %v489
        %v726 = vunpack.c.h.b16 %v489
        %v727 = vunpack.c.l.b16 %v490
        %v728 = vunpack.c.h.b16 %v490
        %v729 = vunpack.c.l.b16 %v491
        %v730 = vunpack.c.h.b16 %v491
        %v731 = vunpack.c.l.b16 %v492
        %v732 = vunpack.c.h.b16 %v492
        %v733 = vpack.c.b16 %v703, %v701
        %v734 = vpack.c.b16 %v704, %v702
        %v735 = vpack.c.b16 %v707, %v705
        %v736 = vpack.c.b16 %v708, %v706
        %v737 = vpack.c.b16 %v711, %v709
        %v738 = vpack.c.b16 %v712, %v710
        %v739 = vpack.c.b16 %v715, %v713
        %v740 = vpack.c.b16 %v716, %v714
        %v741 = vpack.c.b16 %v719, %v717
        %v742 = vpack.c.b16 %v720, %v718
        %v743 = vpack.c.b16 %v723, %v721
        %v744 = vpack.c.b16 %v724, %v722
        %v745 = vpack.c.b16 %v727, %v725
        %v746 = vpack.c.b16 %v728, %v726
        %v747 = vpack.c.b16 %v731, %v729
        %v748 = vpack.c.b16 %v732, %v730
        %765 = vmatprep.subr.bf16.mxu0 %v734
        %766 = vmatpush1.bf16.msra.mxu0 %v733
        %767 = vmatprep.subr.bf16.mxu0 %v736
        %768 = vmatpush1.bf16.msra.mxu0 %v735
        %769 = vmatprep.subr.bf16.mxu0 %v738
        %770 = vmatpush1.bf16.msra.mxu0 %v737
        %771 = vmatprep.subr.bf16.mxu0 %v740
        %772 = vmatpush1.bf16.msra.mxu0 %v739
        %773 = vmatprep.subr.bf16.mxu0 %v742
        %774 = vmatpush1.bf16.msra.mxu0 %v741
        %775 = vmatprep.subr.bf16.mxu0 %v744
        %776 = vmatpush1.bf16.msra.mxu0 %v743
        %777 = vmatprep.subr.bf16.mxu0 %v746
        %778 = vmatpush1.bf16.msra.mxu0 %v745
        %779 = vmatprep.subr.bf16.mxu0 %v748
        %780 = vmatpush1.bf16.msra.mxu0 %v747
        %781 = vmatprep.subr.bf16.mxu0 0
        %782 = vmatpush1.bf16.msra.mxu0 0
        %783 = vmatprep.subr.bf16.mxu0 0
        %784 = vmatpush1.bf16.msra.mxu0 0
        %785 = vmatprep.subr.bf16.mxu0 0
        %786 = vmatpush1.bf16.msra.mxu0 0
        %787 = vmatprep.subr.bf16.mxu0 0
        %788 = vmatpush1.bf16.msra.mxu0 0
        %789 = vmatprep.subr.bf16.mxu0 0
        %790 = vmatpush1.bf16.msra.mxu0 0
        %791 = vmatprep.subr.bf16.mxu0 0
        %792 = vmatpush1.bf16.msra.mxu0 0
        %793 = vmatprep.subr.bf16.mxu0 0
        %794 = vmatpush1.bf16.msra.mxu0 0
        %795 = vmatprep.subr.bf16.mxu0 0
        %796 = vmatpush1.bf16.msra.mxu0 0
        %797 = vmatprep.mubr.bf16.mxu0 0
        %798 = vmatmul.mubr.bf16.gmra.mrb[0].mxu0 %v621
        %v799 = vpop.f32.mrb[0].mxu0
        %v800 = vadd.f32 0.0, %v799
        %v801 = vpop.f32.mrb[0].mxu0
        %v802 = vadd.f32 0.0, %v801
        %v803 = vpop.f32.mrb[0].mxu0
        %v804 = vadd.f32 0.0, %v803
        %v805 = vpop.f32.mrb[0].mxu0
        %v806 = vadd.f32 0.0, %v805
        %807 = vmatprep.mubr.bf16.mxu0 0
        %808 = vmatmul.mubr.bf16.gmra.mrb[0].mxu0 %v622
        %v809 = vpop.f32.mrb[0].mxu0
        %v810 = vadd.f32 0.0, %v809
        %v811 = vpop.f32.mrb[0].mxu0
        %v812 = vadd.f32 0.0, %v811
        %v813 = vpop.f32.mrb[0].mxu0
        %v814 = vadd.f32 0.0, %v813
        %v815 = vpop.f32.mrb[0].mxu0
        %v816 = vadd.f32 0.0, %v815
        %817 = vmatprep.mubr.bf16.mxu0 0
        %818 = vmatmul.mubr.bf16.gmra.mrb[0].mxu0 %v623
        %v819 = vpop.f32.mrb[0].mxu0
        %v820 = vadd.f32 0.0, %v819
        %v821 = vpop.f32.mrb[0].mxu0
        %v822 = vadd.f32 0.0, %v821
        %v823 = vpop.f32.mrb[0].mxu0
        %v824 = vadd.f32 0.0, %v823
        %v825 = vpop.f32.mrb[0].mxu0
        %v826 = vadd.f32 0.0, %v825
        %827 = vmatprep.mubr.bf16.mxu0 0
        %828 = vmatmul.mubr.bf16.gmra.mrb[0].mxu0 %v624
        %v829 = vpop.f32.mrb[0].mxu0
        %v830 = vadd.f32 0.0, %v829
        %v831 = vpop.f32.mrb[0].mxu0
        %v832 = vadd.f32 0.0, %v831
        %v833 = vpop.f32.mrb[0].mxu0
        %v834 = vadd.f32 0.0, %v833
        %v835 = vpop.f32.mrb[0].mxu0
        %v836 = vadd.f32 0.0, %v835
        %837 = vmatprep.mubr.bf16.mxu0 0
        %838 = vmatmul.mubr.bf16.gmra.mrb[0].mxu0 %v625
        %v839 = vpop.f32.mrb[0].mxu0
        %v840 = vadd.f32 0.0, %v839
        %v841 = vpop.f32.mrb[0].mxu0
        %v842 = vadd.f32 0.0, %v841
        %v843 = vpop.f32.mrb[0].mxu0
        %v844 = vadd.f32 0.0, %v843
        %v845 = vpop.f32.mrb[0].mxu0
        %v846 = vadd.f32 0.0, %v845
        %847 = vmatprep.mubr.bf16.mxu0 0
        %848 = vmatmul.mubr.bf16.gmra.mrb[0].mxu0 %v626
        %v849 = vpop.f32.mrb[0].mxu0
        %v850 = vadd.f32 0.0, %v849
        %v851 = vpop.f32.mrb[0].mxu0
        %v852 = vadd.f32 0.0, %v851
        %v853 = vpop.f32.mrb[0].mxu0
        %v854 = vadd.f32 0.0, %v853
        %v855 = vpop.f32.mrb[0].mxu0
        %v856 = vadd.f32 0.0, %v855
        %857 = vmatprep.mubr.bf16.mxu0 0
        %858 = vmatmul.mubr.bf16.gmra.mrb[0].mxu0 %v627
        %v859 = vpop.f32.mrb[0].mxu0
        %v860 = vadd.f32 0.0, %v859
        %v861 = vpop.f32.mrb[0].mxu0
        %v862 = vadd.f32 0.0, %v861
        %v863 = vpop.f32.mrb[0].mxu0
        %v864 = vadd.f32 0.0, %v863
        %v865 = vpop.f32.mrb[0].mxu0
        %v866 = vadd.f32 0.0, %v865
        %867 = vmatprep.mubr.bf16.mxu0 0
        %868 = vmatmul.mubr.bf16.gmra.mrb[0].mxu0 %v628
        %v869 = vpop.f32.mrb[0].mxu0
        %v870 = vadd.f32 0.0, %v869
        %v871 = vpop.f32.mrb[0].mxu0
        %v872 = vadd.f32 0.0, %v871
        %v873 = vpop.f32.mrb[0].mxu0
        %v874 = vadd.f32 0.0, %v873
        %v875 = vpop.f32.mrb[0].mxu0
        %v876 = vadd.f32 0.0, %v875
        %877 = vmatprep.mubr.bf16.mxu0 0
        %878 = vmatmul.mubr.bf16.gmra.mrb[0].mxu0 %v629
        %v879 = vpop.f32.mrb[0].mxu0
        %v880 = vadd.f32 0.0, %v879
        %v881 = vpop.f32.mrb[0].mxu0
        %v882 = vadd.f32 0.0, %v881
        %v883 = vpop.f32.mrb[0].mxu0
        %v884 = vadd.f32 0.0, %v883
        %v885 = vpop.f32.mrb[0].mxu0
        %v886 = vadd.f32 0.0, %v885
        %887 = vmatprep.mubr.bf16.mxu0 0
        %888 = vmatmul.mubr.bf16.gmra.mrb[0].mxu0 %v630
        %v889 = vpop.f32.mrb[0].mxu0
        %v890 = vadd.f32 0.0, %v889
        %v891 = vpop.f32.mrb[0].mxu0
        %v892 = vadd.f32 0.0, %v891
        %v893 = vpop.f32.mrb[0].mxu0
        %v894 = vadd.f32 0.0, %v893
        %v895 = vpop.f32.mrb[0].mxu0
        %v896 = vadd.f32 0.0, %v895
        %897 = vmatprep.mubr.bf16.mxu0 0
        %898 = vmatmul.mubr.bf16.gmra.mrb[0].mxu0 %v631
        %v899 = vpop.f32.mrb[0].mxu0
        %v900 = vadd.f32 0.0, %v899
        %v901 = vpop.f32.mrb[0].mxu0
        %v902 = vadd.f32 0.0, %v901
        %v903 = vpop.f32.mrb[0].mxu0
        %v904 = vadd.f32 0.0, %v903
        %v905 = vpop.f32.mrb[0].mxu0
        %v906 = vadd.f32 0.0, %v905
        %907 = vmatprep.mubr.bf16.mxu0 0
        %908 = vmatmul.mubr.bf16.gmra.mrb[0].mxu0 %v632
        %v909 = vpop.f32.mrb[0].mxu0
        %v910 = vadd.f32 0.0, %v909
        %v911 = vpop.f32.mrb[0].mxu0
        %v912 = vadd.f32 0.0, %v911
        %v913 = vpop.f32.mrb[0].mxu0
        %v914 = vadd.f32 0.0, %v913
        %v915 = vpop.f32.mrb[0].mxu0
        %v916 = vadd.f32 0.0, %v915
        %917 = vmatprep.mubr.bf16.mxu0 0
        %918 = vmatmul.mubr.bf16.gmra.mrb[0].mxu0 %v633
        %v919 = vpop.f32.mrb[0].mxu0
        %v920 = vadd.f32 0.0, %v919
        %v921 = vpop.f32.mrb[0].mxu0
        %v922 = vadd.f32 0.0, %v921
        %v923 = vpop.f32.mrb[0].mxu0
        %v924 = vadd.f32 0.0, %v923
        %v925 = vpop.f32.mrb[0].mxu0
        %v926 = vadd.f32 0.0, %v925
        %927 = vmatprep.mubr.bf16.mxu0 0
        %928 = vmatmul.mubr.bf16.gmra.mrb[0].mxu0 %v634
        %v929 = vpop.f32.mrb[0].mxu0
        %v930 = vadd.f32 0.0, %v929
        %v931 = vpop.f32.mrb[0].mxu0
        %v932 = vadd.f32 0.0, %v931
        %v933 = vpop.f32.mrb[0].mxu0
        %v934 = vadd.f32 0.0, %v933
        %v935 = vpop.f32.mrb[0].mxu0
        %v936 = vadd.f32 0.0, %v935
        %937 = vmatprep.mubr.bf16.mxu0 0
        %938 = vmatmul.mubr.bf16.gmra.mrb[0].mxu0 %v635
        %v939 = vpop.f32.mrb[0].mxu0
        %v940 = vadd.f32 0.0, %v939
        %v941 = vpop.f32.mrb[0].mxu0
        %v942 = vadd.f32 0.0, %v941
        %v943 = vpop.f32.mrb[0].mxu0
        %v944 = vadd.f32 0.0, %v943
        %v945 = vpop.f32.mrb[0].mxu0
        %v946 = vadd.f32 0.0, %v945
        %947 = vmatprep.mubr.bf16.mxu0 0
        %948 = vmatmul.mubr.bf16.gmra.mrb[0].mxu0 %v636
        %v949 = vpop.f32.mrb[0].mxu0
        %v950 = vadd.f32 0.0, %v949
        %v951 = vpop.f32.mrb[0].mxu0
        %v952 = vadd.f32 0.0, %v951
        %v953 = vpop.f32.mrb[0].mxu0
        %v954 = vadd.f32 0.0, %v953
        %v955 = vpop.f32.mrb[0].mxu0
        %v956 = vadd.f32 0.0, %v955
        %957 = vmatprep.mubr.bf16.mxu0 0
        %958 = vmatmul.mubr.bf16.gmra.mrb[0].mxu0 %v637
        %v959 = vpop.f32.mrb[0].mxu0
        %v960 = vadd.f32 0.0, %v959
        %v961 = vpop.f32.mrb[0].mxu0
        %v962 = vadd.f32 0.0, %v961
        %v963 = vpop.f32.mrb[0].mxu0
        %v964 = vadd.f32 0.0, %v963
        %v965 = vpop.f32.mrb[0].mxu0
        %v966 = vadd.f32 0.0, %v965
        %967 = vmatprep.mubr.bf16.mxu0 0
        %968 = vmatmul.mubr.bf16.gmra.mrb[0].mxu0 %v638
        %v969 = vpop.f32.mrb[0].mxu0
        %v970 = vadd.f32 0.0, %v969
        %v971 = vpop.f32.mrb[0].mxu0
        %v972 = vadd.f32 0.0, %v971
        %v973 = vpop.f32.mrb[0].mxu0
        %v974 = vadd.f32 0.0, %v973
        %v975 = vpop.f32.mrb[0].mxu0
        %v976 = vadd.f32 0.0, %v975
        %977 = vmatprep.mubr.bf16.mxu0 0
        %978 = vmatmul.mubr.bf16.gmra.mrb[0].mxu0 %v639
        %v979 = vpop.f32.mrb[0].mxu0
        %v980 = vadd.f32 0.0, %v979
        %v981 = vpop.f32.mrb[0].mxu0
        %v982 = vadd.f32 0.0, %v981
        %v983 = vpop.f32.mrb[0].mxu0
        %v984 = vadd.f32 0.0, %v983
        %v985 = vpop.f32.mrb[0].mxu0
        %v986 = vadd.f32 0.0, %v985
        %987 = vmatprep.mubr.bf16.mxu0 0
        %988 = vmatmul.mubr.bf16.gmra.mrb[0].mxu0 %v640
        %v989 = vpop.f32.mrb[0].mxu0
        %v990 = vadd.f32 0.0, %v989
        %v991 = vpop.f32.mrb[0].mxu0
        %v992 = vadd.f32 0.0, %v991
        %v993 = vpop.f32.mrb[0].mxu0
        %v994 = vadd.f32 0.0, %v993
        %v995 = vpop.f32.mrb[0].mxu0
        %v996 = vadd.f32 0.0, %v995
        %997 = vmatprep.mubr.bf16.mxu0 0
        %998 = vmatmul.mubr.bf16.gmra.mrb[0].mxu0 %v641
        %v999 = vpop.f32.mrb[0].mxu0
        %v1000 = vadd.f32 0.0, %v999
        %v1001 = vpop.f32.mrb[0].mxu0
        %v1002 = vadd.f32 0.0, %v1001
        %v1003 = vpop.f32.mrb[0].mxu0
        %v1004 = vadd.f32 0.0, %v1003
        %v1005 = vpop.f32.mrb[0].mxu0
        %v1006 = vadd.f32 0.0, %v1005
        %1007 = vmatprep.mubr.bf16.mxu0 0
        %1008 = vmatmul.mubr.bf16.gmra.mrb[0].mxu0 %v642
        %v1009 = vpop.f32.mrb[0].mxu0
        %v1010 = vadd.f32 0.0, %v1009
        %v1011 = vpop.f32.mrb[0].mxu0
        %v1012 = vadd.f32 0.0, %v1011
        %v1013 = vpop.f32.mrb[0].mxu0
        %v1014 = vadd.f32 0.0, %v1013
        %v1015 = vpop.f32.mrb[0].mxu0
        %v1016 = vadd.f32 0.0, %v1015
        %1017 = vmatprep.mubr.bf16.mxu0 0
        %1018 = vmatmul.mubr.bf16.gmra.mrb[0].mxu0 %v643
        %v1019 = vpop.f32.mrb[0].mxu0
        %v1020 = vadd.f32 0.0, %v1019
        %v1021 = vpop.f32.mrb[0].mxu0
        %v1022 = vadd.f32 0.0, %v1021
        %v1023 = vpop.f32.mrb[0].mxu0
        %v1024 = vadd.f32 0.0, %v1023
        %v1025 = vpop.f32.mrb[0].mxu0
        %v1026 = vadd.f32 0.0, %v1025
        %1027 = vmatprep.mubr.bf16.mxu0 0
        %1028 = vmatmul.mubr.bf16.gmra.mrb[0].mxu0 %v644
        %v1029 = vpop.f32.mrb[0].mxu0
        %v1030 = vadd.f32 0.0, %v1029
        %v1031 = vpop.f32.mrb[0].mxu0
        %v1032 = vadd.f32 0.0, %v1031
        %v1033 = vpop.f32.mrb[0].mxu0
        %v1034 = vadd.f32 0.0, %v1033
        %v1035 = vpop.f32.mrb[0].mxu0
        %v1036 = vadd.f32 0.0, %v1035
        %1037 = vmatprep.mubr.bf16.mxu0 0
        %1038 = vmatmul.mubr.bf16.gmra.mrb[0].mxu0 %v645
        %v1039 = vpop.f32.mrb[0].mxu0
        %v1040 = vadd.f32 0.0, %v1039
        %v1041 = vpop.f32.mrb[0].mxu0
        %v1042 = vadd.f32 0.0, %v1041
        %v1043 = vpop.f32.mrb[0].mxu0
        %v1044 = vadd.f32 0.0, %v1043
        %v1045 = vpop.f32.mrb[0].mxu0
        %v1046 = vadd.f32 0.0, %v1045
        %1047 = vmatprep.mubr.bf16.mxu0 0
        %1048 = vmatmul.mubr.bf16.gmra.mrb[0].mxu0 %v646
        %v1049 = vpop.f32.mrb[0].mxu0
        %v1050 = vadd.f32 0.0, %v1049
        %v1051 = vpop.f32.mrb[0].mxu0
        %v1052 = vadd.f32 0.0, %v1051
        %v1053 = vpop.f32.mrb[0].mxu0
        %v1054 = vadd.f32 0.0, %v1053
        %v1055 = vpop.f32.mrb[0].mxu0
        %v1056 = vadd.f32 0.0, %v1055
        %1057 = vmatprep.mubr.bf16.mxu0 0
        %1058 = vmatmul.mubr.bf16.gmra.mrb[0].mxu0 %v647
        %v1059 = vpop.f32.mrb[0].mxu0
        %v1060 = vadd.f32 0.0, %v1059
        %v1061 = vpop.f32.mrb[0].mxu0
        %v1062 = vadd.f32 0.0, %v1061
        %v1063 = vpop.f32.mrb[0].mxu0
        %v1064 = vadd.f32 0.0, %v1063
        %v1065 = vpop.f32.mrb[0].mxu0
        %v1066 = vadd.f32 0.0, %v1065
        %1067 = vmatprep.mubr.bf16.mxu0 0
        %1068 = vmatmul.mubr.bf16.gmra.mrb[0].mxu0 %v648
        %v1069 = vpop.f32.mrb[0].mxu0
        %v1070 = vadd.f32 0.0, %v1069
        %v1071 = vpop.f32.mrb[0].mxu0
        %v1072 = vadd.f32 0.0, %v1071
        %v1073 = vpop.f32.mrb[0].mxu0
        %v1074 = vadd.f32 0.0, %v1073
        %v1075 = vpop.f32.mrb[0].mxu0
        %v1076 = vadd.f32 0.0, %v1075
        %1077 = vmatprep.mubr.bf16.mxu0 0
        %1078 = vmatmul.mubr.bf16.gmra.mrb[0].mxu0 %v649
        %v1079 = vpop.f32.mrb[0].mxu0
        %v1080 = vadd.f32 0.0, %v1079
        %v1081 = vpop.f32.mrb[0].mxu0
        %v1082 = vadd.f32 0.0, %v1081
        %v1083 = vpop.f32.mrb[0].mxu0
        %v1084 = vadd.f32 0.0, %v1083
        %v1085 = vpop.f32.mrb[0].mxu0
        %v1086 = vadd.f32 0.0, %v1085
        %1087 = vmatprep.mubr.bf16.mxu0 0
        %1088 = vmatmul.mubr.bf16.gmra.mrb[0].mxu0 %v650
        %v1089 = vpop.f32.mrb[0].mxu0
        %v1090 = vadd.f32 0.0, %v1089
        %v1091 = vpop.f32.mrb[0].mxu0
        %v1092 = vadd.f32 0.0, %v1091
        %v1093 = vpop.f32.mrb[0].mxu0
        %v1094 = vadd.f32 0.0, %v1093
        %v1095 = vpop.f32.mrb[0].mxu0
        %v1096 = vadd.f32 0.0, %v1095
        %1097 = vmatprep.mubr.bf16.mxu0 0
        %1098 = vmatmul.mubr.bf16.gmra.mrb[0].mxu0 %v651
        %v1099 = vpop.f32.mrb[0].mxu0
        %v1100 = vadd.f32 0.0, %v1099
        %v1101 = vpop.f32.mrb[0].mxu0
        %v1102 = vadd.f32 0.0, %v1101
        %v1103 = vpop.f32.mrb[0].mxu0
        %v1104 = vadd.f32 0.0, %v1103
        %v1105 = vpop.f32.mrb[0].mxu0
        %v1106 = vadd.f32 0.0, %v1105
        %1107 = vmatprep.mubr.bf16.mxu0 0
        %1108 = vmatmul.mubr.bf16.gmra.mrb[0].mxu0 %v652
        %v1109 = vpop.f32.mrb[0].mxu0
        %v1110 = vadd.f32 0.0, %v1109
        %v1111 = vpop.f32.mrb[0].mxu0
        %v1112 = vadd.f32 0.0, %v1111
        %v1113 = vpop.f32.mrb[0].mxu0
        %v1114 = vadd.f32 0.0, %v1113
        %v1115 = vpop.f32.mrb[0].mxu0
        %v1116 = vadd.f32 0.0, %v1115
        %1117 = vdwg.mxu0
        %v1182 = vunpack.c.l.b16 %v317
        %v1183 = vunpack.c.h.b16 %v317
        %v1184 = vunpack.c.l.b16 %v318
        %v1185 = vunpack.c.h.b16 %v318
        %v1186 = vunpack.c.l.b16 %v319
        %v1187 = vunpack.c.h.b16 %v319
        %v1188 = vunpack.c.l.b16 %v320
        %v1189 = vunpack.c.h.b16 %v320
        %v1190 = vunpack.c.l.b16 %v321
        %v1191 = vunpack.c.h.b16 %v321
        %v1192 = vunpack.c.l.b16 %v322
        %v1193 = vunpack.c.h.b16 %v322
        %v1194 = vunpack.c.l.b16 %v323
        %v1195 = vunpack.c.h.b16 %v323
        %v1196 = vunpack.c.l.b16 %v324
        %v1197 = vunpack.c.h.b16 %v324
        %v1198 = vunpack.c.l.b16 %v325
        %v1199 = vunpack.c.h.b16 %v325
        %v1200 = vunpack.c.l.b16 %v326
        %v1201 = vunpack.c.h.b16 %v326
        %v1202 = vunpack.c.l.b16 %v327
        %v1203 = vunpack.c.h.b16 %v327
        %v1204 = vunpack.c.l.b16 %v328
        %v1205 = vunpack.c.h.b16 %v328
        %v1206 = vunpack.c.l.b16 %v329
        %v1207 = vunpack.c.h.b16 %v329
        %v1208 = vunpack.c.l.b16 %v330
        %v1209 = vunpack.c.h.b16 %v330
        %v1210 = vunpack.c.l.b16 %v331
        %v1211 = vunpack.c.h.b16 %v331
        %v1212 = vunpack.c.l.b16 %v332
        %v1213 = vunpack.c.h.b16 %v332
        %v1214 = vunpack.c.l.b16 %v333
        %v1215 = vunpack.c.h.b16 %v333
        %v1216 = vunpack.c.l.b16 %v334
        %v1217 = vunpack.c.h.b16 %v334
        %v1218 = vunpack.c.l.b16 %v335
        %v1219 = vunpack.c.h.b16 %v335
        %v1220 = vunpack.c.l.b16 %v336
        %v1221 = vunpack.c.h.b16 %v336
        %v1222 = vunpack.c.l.b16 %v337
        %v1223 = vunpack.c.h.b16 %v337
        %v1224 = vunpack.c.l.b16 %v338
        %v1225 = vunpack.c.h.b16 %v338
        %v1226 = vunpack.c.l.b16 %v339
        %v1227 = vunpack.c.h.b16 %v339
        %v1228 = vunpack.c.l.b16 %v340
        %v1229 = vunpack.c.h.b16 %v340
        %v1230 = vunpack.c.l.b16 %v341
        %v1231 = vunpack.c.h.b16 %v341
        %v1232 = vunpack.c.l.b16 %v342
        %v1233 = vunpack.c.h.b16 %v342
        %v1234 = vunpack.c.l.b16 %v343
        %v1235 = vunpack.c.h.b16 %v343
        %v1236 = vunpack.c.l.b16 %v344
        %v1237 = vunpack.c.h.b16 %v344
        %v1238 = vunpack.c.l.b16 %v345
        %v1239 = vunpack.c.h.b16 %v345
        %v1240 = vunpack.c.l.b16 %v346
        %v1241 = vunpack.c.h.b16 %v346
        %v1242 = vunpack.c.l.b16 %v347
        %v1243 = vunpack.c.h.b16 %v347
        %v1244 = vunpack.c.l.b16 %v348
        %v1245 = vunpack.c.h.b16 %v348
        %v1246 = vunpack.c.l.b16 %v349
        %v1247 = vunpack.c.h.b16 %v349
        %v1248 = vunpack.c.l.b16 %v350
        %v1249 = vunpack.c.h.b16 %v350
        %v1250 = vunpack.c.l.b16 %v351
        %v1251 = vunpack.c.h.b16 %v351
        %v1252 = vunpack.c.l.b16 %v352
        %v1253 = vunpack.c.h.b16 %v352
        %v1254 = vunpack.c.l.b16 %v353
        %v1255 = vunpack.c.h.b16 %v353
        %v1256 = vunpack.c.l.b16 %v354
        %v1257 = vunpack.c.h.b16 %v354
        %v1258 = vunpack.c.l.b16 %v355
        %v1259 = vunpack.c.h.b16 %v355
        %v1260 = vunpack.c.l.b16 %v356
        %v1261 = vunpack.c.h.b16 %v356
        %v1262 = vunpack.c.l.b16 %v357
        %v1263 = vunpack.c.h.b16 %v357
        %v1264 = vunpack.c.l.b16 %v358
        %v1265 = vunpack.c.h.b16 %v358
        %v1266 = vunpack.c.l.b16 %v359
        %v1267 = vunpack.c.h.b16 %v359
        %v1268 = vunpack.c.l.b16 %v360
        %v1269 = vunpack.c.h.b16 %v360
        %v1270 = vunpack.c.l.b16 %v361
        %v1271 = vunpack.c.h.b16 %v361
        %v1272 = vunpack.c.l.b16 %v362
        %v1273 = vunpack.c.h.b16 %v362
        %v1274 = vunpack.c.l.b16 %v363
        %v1275 = vunpack.c.h.b16 %v363
        %v1276 = vunpack.c.l.b16 %v364
        %v1277 = vunpack.c.h.b16 %v364
        %v1278 = vunpack.c.l.b16 %v365
        %v1279 = vunpack.c.h.b16 %v365
        %v1280 = vunpack.c.l.b16 %v366
        %v1281 = vunpack.c.h.b16 %v366
        %v1282 = vunpack.c.l.b16 %v367
        %v1283 = vunpack.c.h.b16 %v367
        %v1284 = vunpack.c.l.b16 %v368
        %v1285 = vunpack.c.h.b16 %v368
        %v1286 = vunpack.c.l.b16 %v369
        %v1287 = vunpack.c.h.b16 %v369
        %v1288 = vunpack.c.l.b16 %v370
        %v1289 = vunpack.c.h.b16 %v370
        %v1290 = vunpack.c.l.b16 %v371
        %v1291 = vunpack.c.h.b16 %v371
        %v1292 = vunpack.c.l.b16 %v372
        %v1293 = vunpack.c.h.b16 %v372
        %v1294 = vunpack.c.l.b16 %v373
        %v1295 = vunpack.c.h.b16 %v373
        %v1296 = vunpack.c.l.b16 %v374
        %v1297 = vunpack.c.h.b16 %v374
        %v1298 = vunpack.c.l.b16 %v375
        %v1299 = vunpack.c.h.b16 %v375
        %v1300 = vunpack.c.l.b16 %v376
        %v1301 = vunpack.c.h.b16 %v376
        %v1302 = vunpack.c.l.b16 %v377
        %v1303 = vunpack.c.h.b16 %v377
        %v1304 = vunpack.c.l.b16 %v378
        %v1305 = vunpack.c.h.b16 %v378
        %v1306 = vunpack.c.l.b16 %v379
        %v1307 = vunpack.c.h.b16 %v379
        %v1308 = vunpack.c.l.b16 %v380
        %v1309 = vunpack.c.h.b16 %v380
        %v1310 = vpack.c.b16 %v1184, %v1182
        %v1311 = vpack.c.b16 %v1185, %v1183
        %v1312 = vpack.c.b16 %v1188, %v1186
        %v1313 = vpack.c.b16 %v1189, %v1187
        %v1314 = vpack.c.b16 %v1192, %v1190
        %v1315 = vpack.c.b16 %v1193, %v1191
        %v1316 = vpack.c.b16 %v1196, %v1194
        %v1317 = vpack.c.b16 %v1197, %v1195
        %v1318 = vpack.c.b16 %v1200, %v1198
        %v1319 = vpack.c.b16 %v1201, %v1199
        %v1320 = vpack.c.b16 %v1204, %v1202
        %v1321 = vpack.c.b16 %v1205, %v1203
        %v1322 = vpack.c.b16 %v1208, %v1206
        %v1323 = vpack.c.b16 %v1209, %v1207
        %v1324 = vpack.c.b16 %v1212, %v1210
        %v1325 = vpack.c.b16 %v1213, %v1211
        %v1326 = vpack.c.b16 %v1216, %v1214
        %v1327 = vpack.c.b16 %v1217, %v1215
        %v1328 = vpack.c.b16 %v1220, %v1218
        %v1329 = vpack.c.b16 %v1221, %v1219
        %v1330 = vpack.c.b16 %v1224, %v1222
        %v1331 = vpack.c.b16 %v1225, %v1223
        %v1332 = vpack.c.b16 %v1228, %v1226
        %v1333 = vpack.c.b16 %v1229, %v1227
        %v1334 = vpack.c.b16 %v1232, %v1230
        %v1335 = vpack.c.b16 %v1233, %v1231
        %v1336 = vpack.c.b16 %v1236, %v1234
        %v1337 = vpack.c.b16 %v1237, %v1235
        %v1338 = vpack.c.b16 %v1240, %v1238
        %v1339 = vpack.c.b16 %v1241, %v1239
        %v1340 = vpack.c.b16 %v1244, %v1242
        %v1341 = vpack.c.b16 %v1245, %v1243
        %v1342 = vpack.c.b16 %v1248, %v1246
        %v1343 = vpack.c.b16 %v1249, %v1247
        %v1344 = vpack.c.b16 %v1252, %v1250
        %v1345 = vpack.c.b16 %v1253, %v1251
        %v1346 = vpack.c.b16 %v1256, %v1254
        %v1347 = vpack.c.b16 %v1257, %v1255
        %v1348 = vpack.c.b16 %v1260, %v1258
        %v1349 = vpack.c.b16 %v1261, %v1259
        %v1350 = vpack.c.b16 %v1264, %v1262
        %v1351 = vpack.c.b16 %v1265, %v1263
        %v1352 = vpack.c.b16 %v1268, %v1266
        %v1353 = vpack.c.b16 %v1269, %v1267
        %v1354 = vpack.c.b16 %v1272, %v1270
        %v1355 = vpack.c.b16 %v1273, %v1271
        %v1356 = vpack.c.b16 %v1276, %v1274
        %v1357 = vpack.c.b16 %v1277, %v1275
        %v1358 = vpack.c.b16 %v1280, %v1278
        %v1359 = vpack.c.b16 %v1281, %v1279
        %v1360 = vpack.c.b16 %v1284, %v1282
        %v1361 = vpack.c.b16 %v1285, %v1283
        %v1362 = vpack.c.b16 %v1288, %v1286
        %v1363 = vpack.c.b16 %v1289, %v1287
        %v1364 = vpack.c.b16 %v1292, %v1290
        %v1365 = vpack.c.b16 %v1293, %v1291
        %v1366 = vpack.c.b16 %v1296, %v1294
        %v1367 = vpack.c.b16 %v1297, %v1295
        %v1368 = vpack.c.b16 %v1300, %v1298
        %v1369 = vpack.c.b16 %v1301, %v1299
        %v1370 = vpack.c.b16 %v1304, %v1302
        %v1371 = vpack.c.b16 %v1305, %v1303
        %v1372 = vpack.c.b16 %v1308, %v1306
        %v1373 = vpack.c.b16 %v1309, %v1307
        %v1470 = vunpack.c.l.b16 %v445
        %v1471 = vunpack.c.h.b16 %v445
        %v1472 = vunpack.c.l.b16 %v446
        %v1473 = vunpack.c.h.b16 %v446
        %v1474 = vunpack.c.l.b16 %v447
        %v1475 = vunpack.c.h.b16 %v447
        %v1476 = vunpack.c.l.b16 %v448
        %v1477 = vunpack.c.h.b16 %v448
        %v1478 = vunpack.c.l.b16 %v449
        %v1479 = vunpack.c.h.b16 %v449
        %v1480 = vunpack.c.l.b16 %v450
        %v1481 = vunpack.c.h.b16 %v450
        %v1482 = vunpack.c.l.b16 %v451
        %v1483 = vunpack.c.h.b16 %v451
        %v1484 = vunpack.c.l.b16 %v452
        %v1485 = vunpack.c.h.b16 %v452
        %v1486 = vunpack.c.l.b16 %v453
        %v1487 = vunpack.c.h.b16 %v453
        %v1488 = vunpack.c.l.b16 %v454
        %v1489 = vunpack.c.h.b16 %v454
        %v1490 = vunpack.c.l.b16 %v455
        %v1491 = vunpack.c.h.b16 %v455
        %v1492 = vunpack.c.l.b16 %v456
        %v1493 = vunpack.c.h.b16 %v456
        %v1494 = vunpack.c.l.b16 %v457
        %v1495 = vunpack.c.h.b16 %v457
        %v1496 = vunpack.c.l.b16 %v458
        %v1497 = vunpack.c.h.b16 %v458
        %v1498 = vunpack.c.l.b16 %v459
        %v1499 = vunpack.c.h.b16 %v459
        %v1500 = vunpack.c.l.b16 %v460
        %v1501 = vunpack.c.h.b16 %v460
        %v1502 = vunpack.c.l.b16 %v461
        %v1503 = vunpack.c.h.b16 %v461
        %v1504 = vunpack.c.l.b16 %v462
        %v1505 = vunpack.c.h.b16 %v462
        %v1506 = vunpack.c.l.b16 %v463
        %v1507 = vunpack.c.h.b16 %v463
        %v1508 = vunpack.c.l.b16 %v464
        %v1509 = vunpack.c.h.b16 %v464
        %v1510 = vunpack.c.l.b16 %v465
        %v1511 = vunpack.c.h.b16 %v465
        %v1512 = vunpack.c.l.b16 %v466
        %v1513 = vunpack.c.h.b16 %v466
        %v1514 = vunpack.c.l.b16 %v467
        %v1515 = vunpack.c.h.b16 %v467
        %v1516 = vunpack.c.l.b16 %v468
        %v1517 = vunpack.c.h.b16 %v468
        %v1518 = vunpack.c.l.b16 %v469
        %v1519 = vunpack.c.h.b16 %v469
        %v1520 = vunpack.c.l.b16 %v470
        %v1521 = vunpack.c.h.b16 %v470
        %v1522 = vunpack.c.l.b16 %v471
        %v1523 = vunpack.c.h.b16 %v471
        %v1524 = vunpack.c.l.b16 %v472
        %v1525 = vunpack.c.h.b16 %v472
        %v1526 = vunpack.c.l.b16 %v473
        %v1527 = vunpack.c.h.b16 %v473
        %v1528 = vunpack.c.l.b16 %v474
        %v1529 = vunpack.c.h.b16 %v474
        %v1530 = vunpack.c.l.b16 %v475
        %v1531 = vunpack.c.h.b16 %v475
        %v1532 = vunpack.c.l.b16 %v476
        %v1533 = vunpack.c.h.b16 %v476
        %v1534 = vpack.c.b16 %v1472, %v1470
        %v1535 = vpack.c.b16 %v1473, %v1471
        %v1536 = vpack.c.b16 %v1476, %v1474
        %v1537 = vpack.c.b16 %v1477, %v1475
        %v1538 = vpack.c.b16 %v1480, %v1478
        %v1539 = vpack.c.b16 %v1481, %v1479
        %v1540 = vpack.c.b16 %v1484, %v1482
        %v1541 = vpack.c.b16 %v1485, %v1483
        %v1542 = vpack.c.b16 %v1488, %v1486
        %v1543 = vpack.c.b16 %v1489, %v1487
        %v1544 = vpack.c.b16 %v1492, %v1490
        %v1545 = vpack.c.b16 %v1493, %v1491
        %v1546 = vpack.c.b16 %v1496, %v1494
        %v1547 = vpack.c.b16 %v1497, %v1495
        %v1548 = vpack.c.b16 %v1500, %v1498
        %v1549 = vpack.c.b16 %v1501, %v1499
        %v1550 = vpack.c.b16 %v1504, %v1502
        %v1551 = vpack.c.b16 %v1505, %v1503
        %v1552 = vpack.c.b16 %v1508, %v1506
        %v1553 = vpack.c.b16 %v1509, %v1507
        %v1554 = vpack.c.b16 %v1512, %v1510
        %v1555 = vpack.c.b16 %v1513, %v1511
        %v1556 = vpack.c.b16 %v1516, %v1514
        %v1557 = vpack.c.b16 %v1517, %v1515
        %v1558 = vpack.c.b16 %v1520, %v1518
        %v1559 = vpack.c.b16 %v1521, %v1519
        %v1560 = vpack.c.b16 %v1524, %v1522
        %v1561 = vpack.c.b16 %v1525, %v1523
        %v1562 = vpack.c.b16 %v1528, %v1526
        %v1563 = vpack.c.b16 %v1529, %v1527
        %v1564 = vpack.c.b16 %v1532, %v1530
        %v1565 = vpack.c.b16 %v1533, %v1531
        %1598 = vmatprep.subr.bf16.mxu0 %v1535
        %1599 = vmatpush1.bf16.msra.mxu0 %v1534
        %1600 = vmatprep.subr.bf16.mxu0 %v1537
        %1601 = vmatpush1.bf16.msra.mxu0 %v1536
        %1602 = vmatprep.subr.bf16.mxu0 %v1539
        %1603 = vmatpush1.bf16.msra.mxu0 %v1538
        %1604 = vmatprep.subr.bf16.mxu0 %v1541
        %1605 = vmatpush1.bf16.msra.mxu0 %v1540
        %1606 = vmatprep.subr.bf16.mxu0 %v1543
        %1607 = vmatpush1.bf16.msra.mxu0 %v1542
        %1608 = vmatprep.subr.bf16.mxu0 %v1545
        %1609 = vmatpush1.bf16.msra.mxu0 %v1544
        %1610 = vmatprep.subr.bf16.mxu0 %v1547
        %1611 = vmatpush1.bf16.msra.mxu0 %v1546
        %1612 = vmatprep.subr.bf16.mxu0 %v1549
        %1613 = vmatpush1.bf16.msra.mxu0 %v1548
        %1614 = vmatprep.subr.bf16.mxu0 %v1551
        %1615 = vmatpush1.bf16.msra.mxu0 %v1550
        %1616 = vmatprep.subr.bf16.mxu0 %v1553
        %1617 = vmatpush1.bf16.msra.mxu0 %v1552
        %1618 = vmatprep.subr.bf16.mxu0 %v1555
        %1619 = vmatpush1.bf16.msra.mxu0 %v1554
        %1620 = vmatprep.subr.bf16.mxu0 %v1557
        %1621 = vmatpush1.bf16.msra.mxu0 %v1556
        %1622 = vmatprep.subr.bf16.mxu0 %v1559
        %1623 = vmatpush1.bf16.msra.mxu0 %v1558
        %1624 = vmatprep.subr.bf16.mxu0 %v1561
        %1625 = vmatpush1.bf16.msra.mxu0 %v1560
        %1626 = vmatprep.subr.bf16.mxu0 %v1563
        %1627 = vmatpush1.bf16.msra.mxu0 %v1562
        %1628 = vmatprep.subr.bf16.mxu0 %v1565
        %1629 = vmatpush1.bf16.msra.mxu0 %v1564
        %1630 = vmatprep.mubr.bf16.mxu0 %v1311
        %1631 = vmatmul.mubr.bf16.gmra.mrb[0].mxu0 %v1310
        %v1632 = vpop.f32.mrb[0].mxu0
        %v1633 = vadd.f32 %v800, %v1632
        %v1634 = vpop.f32.mrb[0].mxu0
        %v1635 = vadd.f32 %v802, %v1634
        %v1636 = vpop.f32.mrb[0].mxu0
        %v1637 = vadd.f32 %v804, %v1636
        %v1638 = vpop.f32.mrb[0].mxu0
        %v1639 = vadd.f32 %v806, %v1638
        %1640 = vmatprep.mubr.bf16.mxu0 %v1313
        %1641 = vmatmul.mubr.bf16.gmra.mrb[0].mxu0 %v1312
        %v1642 = vpop.f32.mrb[0].mxu0
        %v1643 = vadd.f32 %v810, %v1642
        %v1644 = vpop.f32.mrb[0].mxu0
        %v1645 = vadd.f32 %v812, %v1644
        %v1646 = vpop.f32.mrb[0].mxu0
        %v1647 = vadd.f32 %v814, %v1646
        %v1648 = vpop.f32.mrb[0].mxu0
        %v1649 = vadd.f32 %v816, %v1648
        %1650 = vmatprep.mubr.bf16.mxu0 %v1315
        %1651 = vmatmul.mubr.bf16.gmra.mrb[0].mxu0 %v1314
        %v1652 = vpop.f32.mrb[0].mxu0
        %v1653 = vadd.f32 %v820, %v1652
        %v1654 = vpop.f32.mrb[0].mxu0
        %v1655 = vadd.f32 %v822, %v1654
        %v1656 = vpop.f32.mrb[0].mxu0
        %v1657 = vadd.f32 %v824, %v1656
        %v1658 = vpop.f32.mrb[0].mxu0
        %v1659 = vadd.f32 %v826, %v1658
        %1660 = vmatprep.mubr.bf16.mxu0 %v1317
        %1661 = vmatmul.mubr.bf16.gmra.mrb[0].mxu0 %v1316
        %v1662 = vpop.f32.mrb[0].mxu0
        %v1663 = vadd.f32 %v830, %v1662
        %v1664 = vpop.f32.mrb[0].mxu0
        %v1665 = vadd.f32 %v832, %v1664
        %v1666 = vpop.f32.mrb[0].mxu0
        %v1667 = vadd.f32 %v834, %v1666
        %v1668 = vpop.f32.mrb[0].mxu0
        %v1669 = vadd.f32 %v836, %v1668
        %1670 = vmatprep.mubr.bf16.mxu0 %v1319
        %1671 = vmatmul.mubr.bf16.gmra.mrb[0].mxu0 %v1318
        %v1672 = vpop.f32.mrb[0].mxu0
        %v1673 = vadd.f32 %v840, %v1672
        %v1674 = vpop.f32.mrb[0].mxu0
        %v1675 = vadd.f32 %v842, %v1674
        %v1676 = vpop.f32.mrb[0].mxu0
        %v1677 = vadd.f32 %v844, %v1676
        %v1678 = vpop.f32.mrb[0].mxu0
        %v1679 = vadd.f32 %v846, %v1678
        %1680 = vmatprep.mubr.bf16.mxu0 %v1321
        %1681 = vmatmul.mubr.bf16.gmra.mrb[0].mxu0 %v1320
        %v1682 = vpop.f32.mrb[0].mxu0
        %v1683 = vadd.f32 %v850, %v1682
        %v1684 = vpop.f32.mrb[0].mxu0
        %v1685 = vadd.f32 %v852, %v1684
        %v1686 = vpop.f32.mrb[0].mxu0
        %v1687 = vadd.f32 %v854, %v1686
        %v1688 = vpop.f32.mrb[0].mxu0
        %v1689 = vadd.f32 %v856, %v1688
        %1690 = vmatprep.mubr.bf16.mxu0 %v1323
        %1691 = vmatmul.mubr.bf16.gmra.mrb[0].mxu0 %v1322
        %v1692 = vpop.f32.mrb[0].mxu0
        %v1693 = vadd.f32 %v860, %v1692
        %v1694 = vpop.f32.mrb[0].mxu0
        %v1695 = vadd.f32 %v862, %v1694
        %v1696 = vpop.f32.mrb[0].mxu0
        %v1697 = vadd.f32 %v864, %v1696
        %v1698 = vpop.f32.mrb[0].mxu0
        %v1699 = vadd.f32 %v866, %v1698
        %1700 = vmatprep.mubr.bf16.mxu0 %v1325
        %1701 = vmatmul.mubr.bf16.gmra.mrb[0].mxu0 %v1324
        %v1702 = vpop.f32.mrb[0].mxu0
        %v1703 = vadd.f32 %v870, %v1702
        %v1704 = vpop.f32.mrb[0].mxu0
        %v1705 = vadd.f32 %v872, %v1704
        %v1706 = vpop.f32.mrb[0].mxu0
        %v1707 = vadd.f32 %v874, %v1706
        %v1708 = vpop.f32.mrb[0].mxu0
        %v1709 = vadd.f32 %v876, %v1708
        %1710 = vmatprep.mubr.bf16.mxu0 %v1327
        %1711 = vmatmul.mubr.bf16.gmra.mrb[0].mxu0 %v1326
        %v1712 = vpop.f32.mrb[0].mxu0
        %v1713 = vadd.f32 %v880, %v1712
        %v1714 = vpop.f32.mrb[0].mxu0
        %v1715 = vadd.f32 %v882, %v1714
        %v1716 = vpop.f32.mrb[0].mxu0
        %v1717 = vadd.f32 %v884, %v1716
        %v1718 = vpop.f32.mrb[0].mxu0
        %v1719 = vadd.f32 %v886, %v1718
        %1720 = vmatprep.mubr.bf16.mxu0 %v1329
        %1721 = vmatmul.mubr.bf16.gmra.mrb[0].mxu0 %v1328
        %v1722 = vpop.f32.mrb[0].mxu0
        %v1723 = vadd.f32 %v890, %v1722
        %v1724 = vpop.f32.mrb[0].mxu0
        %v1725 = vadd.f32 %v892, %v1724
        %v1726 = vpop.f32.mrb[0].mxu0
        %v1727 = vadd.f32 %v894, %v1726
        %v1728 = vpop.f32.mrb[0].mxu0
        %v1729 = vadd.f32 %v896, %v1728
        %1730 = vmatprep.mubr.bf16.mxu0 %v1331
        %1731 = vmatmul.mubr.bf16.gmra.mrb[0].mxu0 %v1330
        %v1732 = vpop.f32.mrb[0].mxu0
        %v1733 = vadd.f32 %v900, %v1732
        %v1734 = vpop.f32.mrb[0].mxu0
        %v1735 = vadd.f32 %v902, %v1734
        %v1736 = vpop.f32.mrb[0].mxu0
        %v1737 = vadd.f32 %v904, %v1736
        %v1738 = vpop.f32.mrb[0].mxu0
        %v1739 = vadd.f32 %v906, %v1738
        %1740 = vmatprep.mubr.bf16.mxu0 %v1333
        %1741 = vmatmul.mubr.bf16.gmra.mrb[0].mxu0 %v1332
        %v1742 = vpop.f32.mrb[0].mxu0
        %v1743 = vadd.f32 %v910, %v1742
        %v1744 = vpop.f32.mrb[0].mxu0
        %v1745 = vadd.f32 %v912, %v1744
        %v1746 = vpop.f32.mrb[0].mxu0
        %v1747 = vadd.f32 %v914, %v1746
        %v1748 = vpop.f32.mrb[0].mxu0
        %v1749 = vadd.f32 %v916, %v1748
        %1750 = vmatprep.mubr.bf16.mxu0 %v1335
        %1751 = vmatmul.mubr.bf16.gmra.mrb[0].mxu0 %v1334
        %v1752 = vpop.f32.mrb[0].mxu0
        %v1753 = vadd.f32 %v920, %v1752
        %v1754 = vpop.f32.mrb[0].mxu0
        %v1755 = vadd.f32 %v922, %v1754
        %v1756 = vpop.f32.mrb[0].mxu0
        %v1757 = vadd.f32 %v924, %v1756
        %v1758 = vpop.f32.mrb[0].mxu0
        %v1759 = vadd.f32 %v926, %v1758
        %1760 = vmatprep.mubr.bf16.mxu0 %v1337
        %1761 = vmatmul.mubr.bf16.gmra.mrb[0].mxu0 %v1336
        %v1762 = vpop.f32.mrb[0].mxu0
        %v1763 = vadd.f32 %v930, %v1762
        %v1764 = vpop.f32.mrb[0].mxu0
        %v1765 = vadd.f32 %v932, %v1764
        %v1766 = vpop.f32.mrb[0].mxu0
        %v1767 = vadd.f32 %v934, %v1766
        %v1768 = vpop.f32.mrb[0].mxu0
        %v1769 = vadd.f32 %v936, %v1768
        %1770 = vmatprep.mubr.bf16.mxu0 %v1339
        %1771 = vmatmul.mubr.bf16.gmra.mrb[0].mxu0 %v1338
        %v1772 = vpop.f32.mrb[0].mxu0
        %v1773 = vadd.f32 %v940, %v1772
        %v1774 = vpop.f32.mrb[0].mxu0
        %v1775 = vadd.f32 %v942, %v1774
        %v1776 = vpop.f32.mrb[0].mxu0
        %v1777 = vadd.f32 %v944, %v1776
        %v1778 = vpop.f32.mrb[0].mxu0
        %v1779 = vadd.f32 %v946, %v1778
        %1780 = vmatprep.mubr.bf16.mxu0 %v1341
        %1781 = vmatmul.mubr.bf16.gmra.mrb[0].mxu0 %v1340
        %v1782 = vpop.f32.mrb[0].mxu0
        %v1783 = vadd.f32 %v950, %v1782
        %v1784 = vpop.f32.mrb[0].mxu0
        %v1785 = vadd.f32 %v952, %v1784
        %v1786 = vpop.f32.mrb[0].mxu0
        %v1787 = vadd.f32 %v954, %v1786
        %v1788 = vpop.f32.mrb[0].mxu0
        %v1789 = vadd.f32 %v956, %v1788
        %1790 = vmatprep.mubr.bf16.mxu0 %v1343
        %1791 = vmatmul.mubr.bf16.gmra.mrb[0].mxu0 %v1342
        %v1792 = vpop.f32.mrb[0].mxu0
        %v1793 = vadd.f32 %v960, %v1792
        %v1794 = vpop.f32.mrb[0].mxu0
        %v1795 = vadd.f32 %v962, %v1794
        %v1796 = vpop.f32.mrb[0].mxu0
        %v1797 = vadd.f32 %v964, %v1796
        %v1798 = vpop.f32.mrb[0].mxu0
        %v1799 = vadd.f32 %v966, %v1798
        %1800 = vmatprep.mubr.bf16.mxu0 %v1345
        %1801 = vmatmul.mubr.bf16.gmra.mrb[0].mxu0 %v1344
        %v1802 = vpop.f32.mrb[0].mxu0
        %v1803 = vadd.f32 %v970, %v1802
        %v1804 = vpop.f32.mrb[0].mxu0
        %v1805 = vadd.f32 %v972, %v1804
        %v1806 = vpop.f32.mrb[0].mxu0
        %v1807 = vadd.f32 %v974, %v1806
        %v1808 = vpop.f32.mrb[0].mxu0
        %v1809 = vadd.f32 %v976, %v1808
        %1810 = vmatprep.mubr.bf16.mxu0 %v1347
        %1811 = vmatmul.mubr.bf16.gmra.mrb[0].mxu0 %v1346
        %v1812 = vpop.f32.mrb[0].mxu0
        %v1813 = vadd.f32 %v980, %v1812
        %v1814 = vpop.f32.mrb[0].mxu0
        %v1815 = vadd.f32 %v982, %v1814
        %v1816 = vpop.f32.mrb[0].mxu0
        %v1817 = vadd.f32 %v984, %v1816
        %v1818 = vpop.f32.mrb[0].mxu0
        %v1819 = vadd.f32 %v986, %v1818
        %1820 = vmatprep.mubr.bf16.mxu0 %v1349
        %1821 = vmatmul.mubr.bf16.gmra.mrb[0].mxu0 %v1348
        %v1822 = vpop.f32.mrb[0].mxu0
        %v1823 = vadd.f32 %v990, %v1822
        %v1824 = vpop.f32.mrb[0].mxu0
        %v1825 = vadd.f32 %v992, %v1824
        %v1826 = vpop.f32.mrb[0].mxu0
        %v1827 = vadd.f32 %v994, %v1826
        %v1828 = vpop.f32.mrb[0].mxu0
        %v1829 = vadd.f32 %v996, %v1828
        %1830 = vmatprep.mubr.bf16.mxu0 %v1351
        %1831 = vmatmul.mubr.bf16.gmra.mrb[0].mxu0 %v1350
        %v1832 = vpop.f32.mrb[0].mxu0
        %v1833 = vadd.f32 %v1000, %v1832
        %v1834 = vpop.f32.mrb[0].mxu0
        %v1835 = vadd.f32 %v1002, %v1834
        %v1836 = vpop.f32.mrb[0].mxu0
        %v1837 = vadd.f32 %v1004, %v1836
        %v1838 = vpop.f32.mrb[0].mxu0
        %v1839 = vadd.f32 %v1006, %v1838
        %1840 = vmatprep.mubr.bf16.mxu0 %v1353
        %1841 = vmatmul.mubr.bf16.gmra.mrb[0].mxu0 %v1352
        %v1842 = vpop.f32.mrb[0].mxu0
        %v1843 = vadd.f32 %v1010, %v1842
        %v1844 = vpop.f32.mrb[0].mxu0
        %v1845 = vadd.f32 %v1012, %v1844
        %v1846 = vpop.f32.mrb[0].mxu0
        %v1847 = vadd.f32 %v1014, %v1846
        %v1848 = vpop.f32.mrb[0].mxu0
        %v1849 = vadd.f32 %v1016, %v1848
        %1850 = vmatprep.mubr.bf16.mxu0 %v1355
        %1851 = vmatmul.mubr.bf16.gmra.mrb[0].mxu0 %v1354
        %v1852 = vpop.f32.mrb[0].mxu0
        %v1853 = vadd.f32 %v1020, %v1852
        %v1854 = vpop.f32.mrb[0].mxu0
        %v1855 = vadd.f32 %v1022, %v1854
        %v1856 = vpop.f32.mrb[0].mxu0
        %v1857 = vadd.f32 %v1024, %v1856
        %v1858 = vpop.f32.mrb[0].mxu0
        %v1859 = vadd.f32 %v1026, %v1858
        %1860 = vmatprep.mubr.bf16.mxu0 %v1357
        %1861 = vmatmul.mubr.bf16.gmra.mrb[0].mxu0 %v1356
        %v1862 = vpop.f32.mrb[0].mxu0
        %v1863 = vadd.f32 %v1030, %v1862
        %v1864 = vpop.f32.mrb[0].mxu0
        %v1865 = vadd.f32 %v1032, %v1864
        %v1866 = vpop.f32.mrb[0].mxu0
        %v1867 = vadd.f32 %v1034, %v1866
        %v1868 = vpop.f32.mrb[0].mxu0
        %v1869 = vadd.f32 %v1036, %v1868
        %1870 = vmatprep.mubr.bf16.mxu0 %v1359
        %1871 = vmatmul.mubr.bf16.gmra.mrb[0].mxu0 %v1358
        %v1872 = vpop.f32.mrb[0].mxu0
        %v1873 = vadd.f32 %v1040, %v1872
        %v1874 = vpop.f32.mrb[0].mxu0
        %v1875 = vadd.f32 %v1042, %v1874
        %v1876 = vpop.f32.mrb[0].mxu0
        %v1877 = vadd.f32 %v1044, %v1876
        %v1878 = vpop.f32.mrb[0].mxu0
        %v1879 = vadd.f32 %v1046, %v1878
        %1880 = vmatprep.mubr.bf16.mxu0 %v1361
        %1881 = vmatmul.mubr.bf16.gmra.mrb[0].mxu0 %v1360
        %v1882 = vpop.f32.mrb[0].mxu0
        %v1883 = vadd.f32 %v1050, %v1882
        %v1884 = vpop.f32.mrb[0].mxu0
        %v1885 = vadd.f32 %v1052, %v1884
        %v1886 = vpop.f32.mrb[0].mxu0
        %v1887 = vadd.f32 %v1054, %v1886
        %v1888 = vpop.f32.mrb[0].mxu0
        %v1889 = vadd.f32 %v1056, %v1888
        %1890 = vmatprep.mubr.bf16.mxu0 %v1363
        %1891 = vmatmul.mubr.bf16.gmra.mrb[0].mxu0 %v1362
        %v1892 = vpop.f32.mrb[0].mxu0
        %v1893 = vadd.f32 %v1060, %v1892
        %v1894 = vpop.f32.mrb[0].mxu0
        %v1895 = vadd.f32 %v1062, %v1894
        %v1896 = vpop.f32.mrb[0].mxu0
        %v1897 = vadd.f32 %v1064, %v1896
        %v1898 = vpop.f32.mrb[0].mxu0
        %v1899 = vadd.f32 %v1066, %v1898
        %1900 = vmatprep.mubr.bf16.mxu0 %v1365
        %1901 = vmatmul.mubr.bf16.gmra.mrb[0].mxu0 %v1364
        %v1902 = vpop.f32.mrb[0].mxu0
        %v1903 = vadd.f32 %v1070, %v1902
        %v1904 = vpop.f32.mrb[0].mxu0
        %v1905 = vadd.f32 %v1072, %v1904
        %v1906 = vpop.f32.mrb[0].mxu0
        %v1907 = vadd.f32 %v1074, %v1906
        %v1908 = vpop.f32.mrb[0].mxu0
        %v1909 = vadd.f32 %v1076, %v1908
        %1910 = vmatprep.mubr.bf16.mxu0 %v1367
        %1911 = vmatmul.mubr.bf16.gmra.mrb[0].mxu0 %v1366
        %v1912 = vpop.f32.mrb[0].mxu0
        %v1913 = vadd.f32 %v1080, %v1912
        %v1914 = vpop.f32.mrb[0].mxu0
        %v1915 = vadd.f32 %v1082, %v1914
        %v1916 = vpop.f32.mrb[0].mxu0
        %v1917 = vadd.f32 %v1084, %v1916
        %v1918 = vpop.f32.mrb[0].mxu0
        %v1919 = vadd.f32 %v1086, %v1918
        %1920 = vmatprep.mubr.bf16.mxu0 %v1369
        %1921 = vmatmul.mubr.bf16.gmra.mrb[0].mxu0 %v1368
        %v1922 = vpop.f32.mrb[0].mxu0
        %v1923 = vadd.f32 %v1090, %v1922
        %v1924 = vpop.f32.mrb[0].mxu0
        %v1925 = vadd.f32 %v1092, %v1924
        %v1926 = vpop.f32.mrb[0].mxu0
        %v1927 = vadd.f32 %v1094, %v1926
        %v1928 = vpop.f32.mrb[0].mxu0
        %v1929 = vadd.f32 %v1096, %v1928
        %1930 = vmatprep.mubr.bf16.mxu0 %v1371
        %1931 = vmatmul.mubr.bf16.gmra.mrb[0].mxu0 %v1370
        %v1932 = vpop.f32.mrb[0].mxu0
        %v1933 = vadd.f32 %v1100, %v1932
        %v1934 = vpop.f32.mrb[0].mxu0
        %v1935 = vadd.f32 %v1102, %v1934
        %v1936 = vpop.f32.mrb[0].mxu0
        %v1937 = vadd.f32 %v1104, %v1936
        %v1938 = vpop.f32.mrb[0].mxu0
        %v1939 = vadd.f32 %v1106, %v1938
        %1940 = vmatprep.mubr.bf16.mxu0 %v1373
        %1941 = vmatmul.mubr.bf16.gmra.mrb[0].mxu0 %v1372
        %v1942 = vpop.f32.mrb[0].mxu0
        %v1943 = vadd.f32 %v1110, %v1942
        %v1944 = vpop.f32.mrb[0].mxu0
        %v1945 = vadd.f32 %v1112, %v1944
        %v1946 = vpop.f32.mrb[0].mxu0
        %v1947 = vadd.f32 %v1114, %v1946
        %v1948 = vpop.f32.mrb[0].mxu0
        %v1949 = vadd.f32 %v1116, %v1948
        %1950 = vdwg.mxu0
        %v1951 = vld [vmem:[%s4] sm:$0x3]
        %v1953 = vlaneseq
        %v1954 = vshrl.u32 %v1953, 7
        %v1955 = vsub.s32 0, %v1954
        %v1956 = vrot.slane %v1951, %v1955
        %v1957 = vlaneseq
        %v1958 = vshrl.u32 %v1957, 7
        %v1959 = vsub.s32 1, %v1958
        %v1960 = vrot.slane %v1951, %v1959
        %v1963 = vadd.f32 %v1633, %v1956
        %v1964 = vadd.f32 %v1635, %v1960
        %v1965 = vadd.f32 %v1637, %v1956
        %v1966 = vadd.f32 %v1639, %v1960
        %v1967 = vadd.f32 %v1643, %v1956
        %v1968 = vadd.f32 %v1645, %v1960
        %v1969 = vadd.f32 %v1647, %v1956
        %v1970 = vadd.f32 %v1649, %v1960
        %v1971 = vadd.f32 %v1653, %v1956
        %v1972 = vadd.f32 %v1655, %v1960
        %v1973 = vadd.f32 %v1657, %v1956
        %v1974 = vadd.f32 %v1659, %v1960
        %v1975 = vadd.f32 %v1663, %v1956
        %v1976 = vadd.f32 %v1665, %v1960
        %v1977 = vadd.f32 %v1667, %v1956
        %v1978 = vadd.f32 %v1669, %v1960
        %v1979 = vadd.f32 %v1673, %v1956
        %v1980 = vadd.f32 %v1675, %v1960
        %v1981 = vadd.f32 %v1677, %v1956
        %v1982 = vadd.f32 %v1679, %v1960
        %v1983 = vadd.f32 %v1683, %v1956
        %v1984 = vadd.f32 %v1685, %v1960
        %v1985 = vadd.f32 %v1687, %v1956
        %v1986 = vadd.f32 %v1689, %v1960
        %v1987 = vadd.f32 %v1693, %v1956
        %v1988 = vadd.f32 %v1695, %v1960
        %v1989 = vadd.f32 %v1697, %v1956
        %v1990 = vadd.f32 %v1699, %v1960
        %v1991 = vadd.f32 %v1703, %v1956
        %v1992 = vadd.f32 %v1705, %v1960
        %v1993 = vadd.f32 %v1707, %v1956
        %v1994 = vadd.f32 %v1709, %v1960
        %v1995 = vadd.f32 %v1713, %v1956
        %v1996 = vadd.f32 %v1715, %v1960
        %v1997 = vadd.f32 %v1717, %v1956
        %v1998 = vadd.f32 %v1719, %v1960
        %v1999 = vadd.f32 %v1723, %v1956
        %v2000 = vadd.f32 %v1725, %v1960
        %v2001 = vadd.f32 %v1727, %v1956
        %v2002 = vadd.f32 %v1729, %v1960
        %v2003 = vadd.f32 %v1733, %v1956
        %v2004 = vadd.f32 %v1735, %v1960
        %v2005 = vadd.f32 %v1737, %v1956
        %v2006 = vadd.f32 %v1739, %v1960
        %v2007 = vadd.f32 %v1743, %v1956
        %v2008 = vadd.f32 %v1745, %v1960
        %v2009 = vadd.f32 %v1747, %v1956
        %v2010 = vadd.f32 %v1749, %v1960
        %v2011 = vadd.f32 %v1753, %v1956
        %v2012 = vadd.f32 %v1755, %v1960
        %v2013 = vadd.f32 %v1757, %v1956
        %v2014 = vadd.f32 %v1759, %v1960
        %v2015 = vadd.f32 %v1763, %v1956
        %v2016 = vadd.f32 %v1765, %v1960
        %v2017 = vadd.f32 %v1767, %v1956
        %v2018 = vadd.f32 %v1769, %v1960
        %v2019 = vadd.f32 %v1773, %v1956
        %v2020 = vadd.f32 %v1775, %v1960
        %v2021 = vadd.f32 %v1777, %v1956
        %v2022 = vadd.f32 %v1779, %v1960
        %v2023 = vadd.f32 %v1783, %v1956
        %v2024 = vadd.f32 %v1785, %v1960
        %v2025 = vadd.f32 %v1787, %v1956
        %v2026 = vadd.f32 %v1789, %v1960
        %v2027 = vadd.f32 %v1793, %v1956
        %v2028 = vadd.f32 %v1795, %v1960
        %v2029 = vadd.f32 %v1797, %v1956
        %v2030 = vadd.f32 %v1799, %v1960
        %v2031 = vadd.f32 %v1803, %v1956
        %v2032 = vadd.f32 %v1805, %v1960
        %v2033 = vadd.f32 %v1807, %v1956
        %v2034 = vadd.f32 %v1809, %v1960
        %v2035 = vadd.f32 %v1813, %v1956
        %v2036 = vadd.f32 %v1815, %v1960
        %v2037 = vadd.f32 %v1817, %v1956
        %v2038 = vadd.f32 %v1819, %v1960
        %v2039 = vadd.f32 %v1823, %v1956
        %v2040 = vadd.f32 %v1825, %v1960
        %v2041 = vadd.f32 %v1827, %v1956
        %v2042 = vadd.f32 %v1829, %v1960
        %v2043 = vadd.f32 %v1833, %v1956
        %v2044 = vadd.f32 %v1835, %v1960
        %v2045 = vadd.f32 %v1837, %v1956
        %v2046 = vadd.f32 %v1839, %v1960
        %v2047 = vadd.f32 %v1843, %v1956
        %v2048 = vadd.f32 %v1845, %v1960
        %v2049 = vadd.f32 %v1847, %v1956
        %v2050 = vadd.f32 %v1849, %v1960
        %v2051 = vadd.f32 %v1853, %v1956
        %v2052 = vadd.f32 %v1855, %v1960
        %v2053 = vadd.f32 %v1857, %v1956
        %v2054 = vadd.f32 %v1859, %v1960
        %v2055 = vadd.f32 %v1863, %v1956
        %v2056 = vadd.f32 %v1865, %v1960
        %v2057 = vadd.f32 %v1867, %v1956
        %v2058 = vadd.f32 %v1869, %v1960
        %v2059 = vadd.f32 %v1873, %v1956
        %v2060 = vadd.f32 %v1875, %v1960
        %v2061 = vadd.f32 %v1877, %v1956
        %v2062 = vadd.f32 %v1879, %v1960
        %v2063 = vadd.f32 %v1883, %v1956
        %v2064 = vadd.f32 %v1885, %v1960
        %v2065 = vadd.f32 %v1887, %v1956
        %v2066 = vadd.f32 %v1889, %v1960
        %v2067 = vadd.f32 %v1893, %v1956
        %v2068 = vadd.f32 %v1895, %v1960
        %v2069 = vadd.f32 %v1897, %v1956
        %v2070 = vadd.f32 %v1899, %v1960
        %v2071 = vadd.f32 %v1903, %v1956
        %v2072 = vadd.f32 %v1905, %v1960
        %v2073 = vadd.f32 %v1907, %v1956
        %v2074 = vadd.f32 %v1909, %v1960
        %v2075 = vadd.f32 %v1913, %v1956
        %v2076 = vadd.f32 %v1915, %v1960
        %v2077 = vadd.f32 %v1917, %v1956
        %v2078 = vadd.f32 %v1919, %v1960
        %v2079 = vadd.f32 %v1923, %v1956
        %v2080 = vadd.f32 %v1925, %v1960
        %v2081 = vadd.f32 %v1927, %v1956
        %v2082 = vadd.f32 %v1929, %v1960
        %v2083 = vadd.f32 %v1933, %v1956
        %v2084 = vadd.f32 %v1935, %v1960
        %v2085 = vadd.f32 %v1937, %v1956
        %v2086 = vadd.f32 %v1939, %v1960
        %v2087 = vadd.f32 %v1943, %v1956
        %v2088 = vadd.f32 %v1945, %v1960
        %v2089 = vadd.f32 %v1947, %v1956
        %v2090 = vadd.f32 %v1949, %v1960
        %v2091 = vunpack.c.l.bf16 %v317
        %v2092 = vunpack.c.h.bf16 %v317
        %v2093 = vunpack.c.l.bf16 %v318
        %v2094 = vunpack.c.h.bf16 %v318
        %v2095 = vunpack.c.l.bf16 %v319
        %v2096 = vunpack.c.h.bf16 %v319
        %v2097 = vunpack.c.l.bf16 %v320
        %v2098 = vunpack.c.h.bf16 %v320
        %v2099 = vunpack.c.l.bf16 %v321
        %v2100 = vunpack.c.h.bf16 %v321
        %v2101 = vunpack.c.l.bf16 %v322
        %v2102 = vunpack.c.h.bf16 %v322
        %v2103 = vunpack.c.l.bf16 %v323
        %v2104 = vunpack.c.h.bf16 %v323
        %v2105 = vunpack.c.l.bf16 %v324
        %v2106 = vunpack.c.h.bf16 %v324
        %v2107 = vunpack.c.l.bf16 %v325
        %v2108 = vunpack.c.h.bf16 %v325
        %v2109 = vunpack.c.l.bf16 %v326
        %v2110 = vunpack.c.h.bf16 %v326
        %v2111 = vunpack.c.l.bf16 %v327
        %v2112 = vunpack.c.h.bf16 %v327
        %v2113 = vunpack.c.l.bf16 %v328
        %v2114 = vunpack.c.h.bf16 %v328
        %v2115 = vunpack.c.l.bf16 %v329
        %v2116 = vunpack.c.h.bf16 %v329
        %v2117 = vunpack.c.l.bf16 %v330
        %v2118 = vunpack.c.h.bf16 %v330
        %v2119 = vunpack.c.l.bf16 %v331
        %v2120 = vunpack.c.h.bf16 %v331
        %v2121 = vunpack.c.l.bf16 %v332
        %v2122 = vunpack.c.h.bf16 %v332
        %v2123 = vunpack.c.l.bf16 %v333
        %v2124 = vunpack.c.h.bf16 %v333
        %v2125 = vunpack.c.l.bf16 %v334
        %v2126 = vunpack.c.h.bf16 %v334
        %v2127 = vunpack.c.l.bf16 %v335
        %v2128 = vunpack.c.h.bf16 %v335
        %v2129 = vunpack.c.l.bf16 %v336
        %v2130 = vunpack.c.h.bf16 %v336
        %v2131 = vunpack.c.l.bf16 %v337
        %v2132 = vunpack.c.h.bf16 %v337
        %v2133 = vunpack.c.l.bf16 %v338
        %v2134 = vunpack.c.h.bf16 %v338
        %v2135 = vunpack.c.l.bf16 %v339
        %v2136 = vunpack.c.h.bf16 %v339
        %v2137 = vunpack.c.l.bf16 %v340
        %v2138 = vunpack.c.h.bf16 %v340
        %v2139 = vunpack.c.l.bf16 %v341
        %v2140 = vunpack.c.h.bf16 %v341
        %v2141 = vunpack.c.l.bf16 %v342
        %v2142 = vunpack.c.h.bf16 %v342
        %v2143 = vunpack.c.l.bf16 %v343
        %v2144 = vunpack.c.h.bf16 %v343
        %v2145 = vunpack.c.l.bf16 %v344
        %v2146 = vunpack.c.h.bf16 %v344
        %v2147 = vunpack.c.l.bf16 %v345
        %v2148 = vunpack.c.h.bf16 %v345
        %v2149 = vunpack.c.l.bf16 %v346
        %v2150 = vunpack.c.h.bf16 %v346
        %v2151 = vunpack.c.l.bf16 %v347
        %v2152 = vunpack.c.h.bf16 %v347
        %v2153 = vunpack.c.l.bf16 %v348
        %v2154 = vunpack.c.h.bf16 %v348
        %v2155 = vunpack.c.l.bf16 %v349
        %v2156 = vunpack.c.h.bf16 %v349
        %v2157 = vunpack.c.l.bf16 %v350
        %v2158 = vunpack.c.h.bf16 %v350
        %v2159 = vunpack.c.l.bf16 %v351
        %v2160 = vunpack.c.h.bf16 %v351
        %v2161 = vunpack.c.l.bf16 %v352
        %v2162 = vunpack.c.h.bf16 %v352
        %v2163 = vunpack.c.l.bf16 %v353
        %v2164 = vunpack.c.h.bf16 %v353
        %v2165 = vunpack.c.l.bf16 %v354
        %v2166 = vunpack.c.h.bf16 %v354
        %v2167 = vunpack.c.l.bf16 %v355
        %v2168 = vunpack.c.h.bf16 %v355
        %v2169 = vunpack.c.l.bf16 %v356
        %v2170 = vunpack.c.h.bf16 %v356
        %v2171 = vunpack.c.l.bf16 %v357
        %v2172 = vunpack.c.h.bf16 %v357
        %v2173 = vunpack.c.l.bf16 %v358
        %v2174 = vunpack.c.h.bf16 %v358
        %v2175 = vunpack.c.l.bf16 %v359
        %v2176 = vunpack.c.h.bf16 %v359
        %v2177 = vunpack.c.l.bf16 %v360
        %v2178 = vunpack.c.h.bf16 %v360
        %v2179 = vunpack.c.l.bf16 %v361
        %v2180 = vunpack.c.h.bf16 %v361
        %v2181 = vunpack.c.l.bf16 %v362
        %v2182 = vunpack.c.h.bf16 %v362
        %v2183 = vunpack.c.l.bf16 %v363
        %v2184 = vunpack.c.h.bf16 %v363
        %v2185 = vunpack.c.l.bf16 %v364
        %v2186 = vunpack.c.h.bf16 %v364
        %v2187 = vunpack.c.l.bf16 %v365
        %v2188 = vunpack.c.h.bf16 %v365
        %v2189 = vunpack.c.l.bf16 %v366
        %v2190 = vunpack.c.h.bf16 %v366
        %v2191 = vunpack.c.l.bf16 %v367
        %v2192 = vunpack.c.h.bf16 %v367
        %v2193 = vunpack.c.l.bf16 %v368
        %v2194 = vunpack.c.h.bf16 %v368
        %v2195 = vunpack.c.l.bf16 %v369
        %v2196 = vunpack.c.h.bf16 %v369
        %v2197 = vunpack.c.l.bf16 %v370
        %v2198 = vunpack.c.h.bf16 %v370
        %v2199 = vunpack.c.l.bf16 %v371
        %v2200 = vunpack.c.h.bf16 %v371
        %v2201 = vunpack.c.l.bf16 %v372
        %v2202 = vunpack.c.h.bf16 %v372
        %v2203 = vunpack.c.l.bf16 %v373
        %v2204 = vunpack.c.h.bf16 %v373
        %v2205 = vunpack.c.l.bf16 %v374
        %v2206 = vunpack.c.h.bf16 %v374
        %v2207 = vunpack.c.l.bf16 %v375
        %v2208 = vunpack.c.h.bf16 %v375
        %v2209 = vunpack.c.l.bf16 %v376
        %v2210 = vunpack.c.h.bf16 %v376
        %v2211 = vunpack.c.l.bf16 %v377
        %v2212 = vunpack.c.h.bf16 %v377
        %v2213 = vunpack.c.l.bf16 %v378
        %v2214 = vunpack.c.h.bf16 %v378
        %v2215 = vunpack.c.l.bf16 %v379
        %v2216 = vunpack.c.h.bf16 %v379
        %v2217 = vunpack.c.l.bf16 %v380
        %v2218 = vunpack.c.h.bf16 %v380
        %v2219 = vadd.f32 %v2091, %v1963
        %v2220 = vadd.f32 %v2092, %v1964
        %v2221 = vadd.f32 %v2093, %v1965
        %v2222 = vadd.f32 %v2094, %v1966
        %v2223 = vadd.f32 %v2095, %v1967
        %v2224 = vadd.f32 %v2096, %v1968
        %v2225 = vadd.f32 %v2097, %v1969
        %v2226 = vadd.f32 %v2098, %v1970
        %v2227 = vadd.f32 %v2099, %v1971
        %v2228 = vadd.f32 %v2100, %v1972
        %v2229 = vadd.f32 %v2101, %v1973
        %v2230 = vadd.f32 %v2102, %v1974
        %v2231 = vadd.f32 %v2103, %v1975
        %v2232 = vadd.f32 %v2104, %v1976
        %v2233 = vadd.f32 %v2105, %v1977
        %v2234 = vadd.f32 %v2106, %v1978
        %v2235 = vadd.f32 %v2107, %v1979
        %v2236 = vadd.f32 %v2108, %v1980
        %v2237 = vadd.f32 %v2109, %v1981
        %v2238 = vadd.f32 %v2110, %v1982
        %v2239 = vadd.f32 %v2111, %v1983
        %v2240 = vadd.f32 %v2112, %v1984
        %v2241 = vadd.f32 %v2113, %v1985
        %v2242 = vadd.f32 %v2114, %v1986
        %v2243 = vadd.f32 %v2115, %v1987
        %v2244 = vadd.f32 %v2116, %v1988
        %v2245 = vadd.f32 %v2117, %v1989
        %v2246 = vadd.f32 %v2118, %v1990
        %v2247 = vadd.f32 %v2119, %v1991
        %v2248 = vadd.f32 %v2120, %v1992
        %v2249 = vadd.f32 %v2121, %v1993
        %v2250 = vadd.f32 %v2122, %v1994
        %v2251 = vadd.f32 %v2123, %v1995
        %v2252 = vadd.f32 %v2124, %v1996
        %v2253 = vadd.f32 %v2125, %v1997
        %v2254 = vadd.f32 %v2126, %v1998
        %v2255 = vadd.f32 %v2127, %v1999
        %v2256 = vadd.f32 %v2128, %v2000
        %v2257 = vadd.f32 %v2129, %v2001
        %v2258 = vadd.f32 %v2130, %v2002
        %v2259 = vadd.f32 %v2131, %v2003
        %v2260 = vadd.f32 %v2132, %v2004
        %v2261 = vadd.f32 %v2133, %v2005
        %v2262 = vadd.f32 %v2134, %v2006
        %v2263 = vadd.f32 %v2135, %v2007
        %v2264 = vadd.f32 %v2136, %v2008
        %v2265 = vadd.f32 %v2137, %v2009
        %v2266 = vadd.f32 %v2138, %v2010
        %v2267 = vadd.f32 %v2139, %v2011
        %v2268 = vadd.f32 %v2140, %v2012
        %v2269 = vadd.f32 %v2141, %v2013
        %v2270 = vadd.f32 %v2142, %v2014
        %v2271 = vadd.f32 %v2143, %v2015
        %v2272 = vadd.f32 %v2144, %v2016
        %v2273 = vadd.f32 %v2145, %v2017
        %v2274 = vadd.f32 %v2146, %v2018
        %v2275 = vadd.f32 %v2147, %v2019
        %v2276 = vadd.f32 %v2148, %v2020
        %v2277 = vadd.f32 %v2149, %v2021
        %v2278 = vadd.f32 %v2150, %v2022
        %v2279 = vadd.f32 %v2151, %v2023
        %v2280 = vadd.f32 %v2152, %v2024
        %v2281 = vadd.f32 %v2153, %v2025
        %v2282 = vadd.f32 %v2154, %v2026
        %v2283 = vadd.f32 %v2155, %v2027
        %v2284 = vadd.f32 %v2156, %v2028
        %v2285 = vadd.f32 %v2157, %v2029
        %v2286 = vadd.f32 %v2158, %v2030
        %v2287 = vadd.f32 %v2159, %v2031
        %v2288 = vadd.f32 %v2160, %v2032
        %v2289 = vadd.f32 %v2161, %v2033
        %v2290 = vadd.f32 %v2162, %v2034
        %v2291 = vadd.f32 %v2163, %v2035
        %v2292 = vadd.f32 %v2164, %v2036
        %v2293 = vadd.f32 %v2165, %v2037
        %v2294 = vadd.f32 %v2166, %v2038
        %v2295 = vadd.f32 %v2167, %v2039
        %v2296 = vadd.f32 %v2168, %v2040
        %v2297 = vadd.f32 %v2169, %v2041
        %v2298 = vadd.f32 %v2170, %v2042
        %v2299 = vadd.f32 %v2171, %v2043
        %v2300 = vadd.f32 %v2172, %v2044
        %v2301 = vadd.f32 %v2173, %v2045
        %v2302 = vadd.f32 %v2174, %v2046
        %v2303 = vadd.f32 %v2175, %v2047
        %v2304 = vadd.f32 %v2176, %v2048
        %v2305 = vadd.f32 %v2177, %v2049
        %v2306 = vadd.f32 %v2178, %v2050
        %v2307 = vadd.f32 %v2179, %v2051
        %v2308 = vadd.f32 %v2180, %v2052
        %v2309 = vadd.f32 %v2181, %v2053
        %v2310 = vadd.f32 %v2182, %v2054
        %v2311 = vadd.f32 %v2183, %v2055
        %v2312 = vadd.f32 %v2184, %v2056
        %v2313 = vadd.f32 %v2185, %v2057
        %v2314 = vadd.f32 %v2186, %v2058
        %v2315 = vadd.f32 %v2187, %v2059
        %v2316 = vadd.f32 %v2188, %v2060
        %v2317 = vadd.f32 %v2189, %v2061
        %v2318 = vadd.f32 %v2190, %v2062
        %v2319 = vadd.f32 %v2191, %v2063
        %v2320 = vadd.f32 %v2192, %v2064
        %v2321 = vadd.f32 %v2193, %v2065
        %v2322 = vadd.f32 %v2194, %v2066
        %v2323 = vadd.f32 %v2195, %v2067
        %v2324 = vadd.f32 %v2196, %v2068
        %v2325 = vadd.f32 %v2197, %v2069
        %v2326 = vadd.f32 %v2198, %v2070
        %v2327 = vadd.f32 %v2199, %v2071
        %v2328 = vadd.f32 %v2200, %v2072
        %v2329 = vadd.f32 %v2201, %v2073
        %v2330 = vadd.f32 %v2202, %v2074
        %v2331 = vadd.f32 %v2203, %v2075
        %v2332 = vadd.f32 %v2204, %v2076
        %v2333 = vadd.f32 %v2205, %v2077
        %v2334 = vadd.f32 %v2206, %v2078
        %v2335 = vadd.f32 %v2207, %v2079
        %v2336 = vadd.f32 %v2208, %v2080
        %v2337 = vadd.f32 %v2209, %v2081
        %v2338 = vadd.f32 %v2210, %v2082
        %v2339 = vadd.f32 %v2211, %v2083
        %v2340 = vadd.f32 %v2212, %v2084
        %v2341 = vadd.f32 %v2213, %v2085
        %v2342 = vadd.f32 %v2214, %v2086
        %v2343 = vadd.f32 %v2215, %v2087
        %v2344 = vadd.f32 %v2216, %v2088
        %v2345 = vadd.f32 %v2217, %v2089
        %v2346 = vadd.f32 %v2218, %v2090
        %v2347 = vpack.c.bf16 %v2221, %v2219
        %v2348 = vpack.c.bf16 %v2222, %v2220
        %v2349 = vpack.c.bf16 %v2225, %v2223
        %v2350 = vpack.c.bf16 %v2226, %v2224
        %v2351 = vpack.c.bf16 %v2229, %v2227
        %v2352 = vpack.c.bf16 %v2230, %v2228
        %v2353 = vpack.c.bf16 %v2233, %v2231
        %v2354 = vpack.c.bf16 %v2234, %v2232
        %v2355 = vpack.c.bf16 %v2237, %v2235
        %v2356 = vpack.c.bf16 %v2238, %v2236
        %v2357 = vpack.c.bf16 %v2241, %v2239
        %v2358 = vpack.c.bf16 %v2242, %v2240
        %v2359 = vpack.c.bf16 %v2245, %v2243
        %v2360 = vpack.c.bf16 %v2246, %v2244
        %v2361 = vpack.c.bf16 %v2249, %v2247
        %v2362 = vpack.c.bf16 %v2250, %v2248
        %v2363 = vpack.c.bf16 %v2253, %v2251
        %v2364 = vpack.c.bf16 %v2254, %v2252
        %v2365 = vpack.c.bf16 %v2257, %v2255
        %v2366 = vpack.c.bf16 %v2258, %v2256
        %v2367 = vpack.c.bf16 %v2261, %v2259
        %v2368 = vpack.c.bf16 %v2262, %v2260
        %v2369 = vpack.c.bf16 %v2265, %v2263
        %v2370 = vpack.c.bf16 %v2266, %v2264
        %v2371 = vpack.c.bf16 %v2269, %v2267
        %v2372 = vpack.c.bf16 %v2270, %v2268
        %v2373 = vpack.c.bf16 %v2273, %v2271
        %v2374 = vpack.c.bf16 %v2274, %v2272
        %v2375 = vpack.c.bf16 %v2277, %v2275
        %v2376 = vpack.c.bf16 %v2278, %v2276
        %v2377 = vpack.c.bf16 %v2281, %v2279
        %v2378 = vpack.c.bf16 %v2282, %v2280
        %v2379 = vpack.c.bf16 %v2285, %v2283
        %v2380 = vpack.c.bf16 %v2286, %v2284
        %v2381 = vpack.c.bf16 %v2289, %v2287
        %v2382 = vpack.c.bf16 %v2290, %v2288
        %v2383 = vpack.c.bf16 %v2293, %v2291
        %v2384 = vpack.c.bf16 %v2294, %v2292
        %v2385 = vpack.c.bf16 %v2297, %v2295
        %v2386 = vpack.c.bf16 %v2298, %v2296
        %v2387 = vpack.c.bf16 %v2301, %v2299
        %v2388 = vpack.c.bf16 %v2302, %v2300
        %v2389 = vpack.c.bf16 %v2305, %v2303
        %v2390 = vpack.c.bf16 %v2306, %v2304
        %v2391 = vpack.c.bf16 %v2309, %v2307
        %v2392 = vpack.c.bf16 %v2310, %v2308
        %v2393 = vpack.c.bf16 %v2313, %v2311
        %v2394 = vpack.c.bf16 %v2314, %v2312
        %v2395 = vpack.c.bf16 %v2317, %v2315
        %v2396 = vpack.c.bf16 %v2318, %v2316
        %v2397 = vpack.c.bf16 %v2321, %v2319
        %v2398 = vpack.c.bf16 %v2322, %v2320
        %v2399 = vpack.c.bf16 %v2325, %v2323
        %v2400 = vpack.c.bf16 %v2326, %v2324
        %v2401 = vpack.c.bf16 %v2329, %v2327
        %v2402 = vpack.c.bf16 %v2330, %v2328
        %v2403 = vpack.c.bf16 %v2333, %v2331
        %v2404 = vpack.c.bf16 %v2334, %v2332
        %v2405 = vpack.c.bf16 %v2337, %v2335
        %v2406 = vpack.c.bf16 %v2338, %v2336
        %v2407 = vpack.c.bf16 %v2341, %v2339
        %v2408 = vpack.c.bf16 %v2342, %v2340
        %v2409 = vpack.c.bf16 %v2345, %v2343
        %v2410 = vpack.c.bf16 %v2346, %v2344
        %v2475 = vunpack.c.l.b16 %v2347
        %v2476 = vunpack.c.l.b16 %v2348
        %v2477 = vunpack.c.h.b16 %v2347
        %v2478 = vunpack.c.h.b16 %v2348
        %v2479 = vunpack.c.l.b16 %v2349
        %v2480 = vunpack.c.l.b16 %v2350
        %v2481 = vunpack.c.h.b16 %v2349
        %v2482 = vunpack.c.h.b16 %v2350
        %v2483 = vunpack.c.l.b16 %v2351
        %v2484 = vunpack.c.l.b16 %v2352
        %v2485 = vunpack.c.h.b16 %v2351
        %v2486 = vunpack.c.h.b16 %v2352
        %v2487 = vunpack.c.l.b16 %v2353
        %v2488 = vunpack.c.l.b16 %v2354
        %v2489 = vunpack.c.h.b16 %v2353
        %v2490 = vunpack.c.h.b16 %v2354
        %v2491 = vunpack.c.l.b16 %v2355
        %v2492 = vunpack.c.l.b16 %v2356
        %v2493 = vunpack.c.h.b16 %v2355
        %v2494 = vunpack.c.h.b16 %v2356
        %v2495 = vunpack.c.l.b16 %v2357
        %v2496 = vunpack.c.l.b16 %v2358
        %v2497 = vunpack.c.h.b16 %v2357
        %v2498 = vunpack.c.h.b16 %v2358
        %v2499 = vunpack.c.l.b16 %v2359
        %v2500 = vunpack.c.l.b16 %v2360
        %v2501 = vunpack.c.h.b16 %v2359
        %v2502 = vunpack.c.h.b16 %v2360
        %v2503 = vunpack.c.l.b16 %v2361
        %v2504 = vunpack.c.l.b16 %v2362
        %v2505 = vunpack.c.h.b16 %v2361
        %v2506 = vunpack.c.h.b16 %v2362
        %v2507 = vunpack.c.l.b16 %v2363
        %v2508 = vunpack.c.l.b16 %v2364
        %v2509 = vunpack.c.h.b16 %v2363
        %v2510 = vunpack.c.h.b16 %v2364
        %v2511 = vunpack.c.l.b16 %v2365
        %v2512 = vunpack.c.l.b16 %v2366
        %v2513 = vunpack.c.h.b16 %v2365
        %v2514 = vunpack.c.h.b16 %v2366
        %v2515 = vunpack.c.l.b16 %v2367
        %v2516 = vunpack.c.l.b16 %v2368
        %v2517 = vunpack.c.h.b16 %v2367
        %v2518 = vunpack.c.h.b16 %v2368
        %v2519 = vunpack.c.l.b16 %v2369
        %v2520 = vunpack.c.l.b16 %v2370
        %v2521 = vunpack.c.h.b16 %v2369
        %v2522 = vunpack.c.h.b16 %v2370
        %v2523 = vunpack.c.l.b16 %v2371
        %v2524 = vunpack.c.l.b16 %v2372
        %v2525 = vunpack.c.h.b16 %v2371
        %v2526 = vunpack.c.h.b16 %v2372
        %v2527 = vunpack.c.l.b16 %v2373
        %v2528 = vunpack.c.l.b16 %v2374
        %v2529 = vunpack.c.h.b16 %v2373
        %v2530 = vunpack.c.h.b16 %v2374
        %v2531 = vunpack.c.l.b16 %v2375
        %v2532 = vunpack.c.l.b16 %v2376
        %v2533 = vunpack.c.h.b16 %v2375
        %v2534 = vunpack.c.h.b16 %v2376
        %v2535 = vunpack.c.l.b16 %v2377
        %v2536 = vunpack.c.l.b16 %v2378
        %v2537 = vunpack.c.h.b16 %v2377
        %v2538 = vunpack.c.h.b16 %v2378
        %v2539 = vunpack.c.l.b16 %v2379
        %v2540 = vunpack.c.l.b16 %v2380
        %v2541 = vunpack.c.h.b16 %v2379
        %v2542 = vunpack.c.h.b16 %v2380
        %v2543 = vunpack.c.l.b16 %v2381
        %v2544 = vunpack.c.l.b16 %v2382
        %v2545 = vunpack.c.h.b16 %v2381
        %v2546 = vunpack.c.h.b16 %v2382
        %v2547 = vunpack.c.l.b16 %v2383
        %v2548 = vunpack.c.l.b16 %v2384
        %v2549 = vunpack.c.h.b16 %v2383
        %v2550 = vunpack.c.h.b16 %v2384
        %v2551 = vunpack.c.l.b16 %v2385
        %v2552 = vunpack.c.l.b16 %v2386
        %v2553 = vunpack.c.h.b16 %v2385
        %v2554 = vunpack.c.h.b16 %v2386
        %v2555 = vunpack.c.l.b16 %v2387
        %v2556 = vunpack.c.l.b16 %v2388
        %v2557 = vunpack.c.h.b16 %v2387
        %v2558 = vunpack.c.h.b16 %v2388
        %v2559 = vunpack.c.l.b16 %v2389
        %v2560 = vunpack.c.l.b16 %v2390
        %v2561 = vunpack.c.h.b16 %v2389
        %v2562 = vunpack.c.h.b16 %v2390
        %v2563 = vunpack.c.l.b16 %v2391
        %v2564 = vunpack.c.l.b16 %v2392
        %v2565 = vunpack.c.h.b16 %v2391
        %v2566 = vunpack.c.h.b16 %v2392
        %v2567 = vunpack.c.l.b16 %v2393
        %v2568 = vunpack.c.l.b16 %v2394
        %v2569 = vunpack.c.h.b16 %v2393
        %v2570 = vunpack.c.h.b16 %v2394
        %v2571 = vunpack.c.l.b16 %v2395
        %v2572 = vunpack.c.l.b16 %v2396
        %v2573 = vunpack.c.h.b16 %v2395
        %v2574 = vunpack.c.h.b16 %v2396
        %v2575 = vunpack.c.l.b16 %v2397
        %v2576 = vunpack.c.l.b16 %v2398
        %v2577 = vunpack.c.h.b16 %v2397
        %v2578 = vunpack.c.h.b16 %v2398
        %v2579 = vunpack.c.l.b16 %v2399
        %v2580 = vunpack.c.l.b16 %v2400
        %v2581 = vunpack.c.h.b16 %v2399
        %v2582 = vunpack.c.h.b16 %v2400
        %v2583 = vunpack.c.l.b16 %v2401
        %v2584 = vunpack.c.l.b16 %v2402
        %v2585 = vunpack.c.h.b16 %v2401
        %v2586 = vunpack.c.h.b16 %v2402
        %v2587 = vunpack.c.l.b16 %v2403
        %v2588 = vunpack.c.l.b16 %v2404
        %v2589 = vunpack.c.h.b16 %v2403
        %v2590 = vunpack.c.h.b16 %v2404
        %v2591 = vunpack.c.l.b16 %v2405
        %v2592 = vunpack.c.l.b16 %v2406
        %v2593 = vunpack.c.h.b16 %v2405
        %v2594 = vunpack.c.h.b16 %v2406
        %v2595 = vunpack.c.l.b16 %v2407
        %v2596 = vunpack.c.l.b16 %v2408
        %v2597 = vunpack.c.h.b16 %v2407
        %v2598 = vunpack.c.h.b16 %v2408
        %v2599 = vunpack.c.l.b16 %v2409
        %v2600 = vunpack.c.l.b16 %v2410
        %v2601 = vunpack.c.h.b16 %v2409
        %v2602 = vunpack.c.h.b16 %v2410
        %v2603 = vpack.c.b16 %v2476, %v2475
        %v2604 = vpack.c.b16 %v2478, %v2477
        %v2605 = vpack.c.b16 %v2480, %v2479
        %v2606 = vpack.c.b16 %v2482, %v2481
        %v2607 = vpack.c.b16 %v2484, %v2483
        %v2608 = vpack.c.b16 %v2486, %v2485
        %v2609 = vpack.c.b16 %v2488, %v2487
        %v2610 = vpack.c.b16 %v2490, %v2489
        %v2611 = vpack.c.b16 %v2492, %v2491
        %v2612 = vpack.c.b16 %v2494, %v2493
        %v2613 = vpack.c.b16 %v2496, %v2495
        %v2614 = vpack.c.b16 %v2498, %v2497
        %v2615 = vpack.c.b16 %v2500, %v2499
        %v2616 = vpack.c.b16 %v2502, %v2501
        %v2617 = vpack.c.b16 %v2504, %v2503
        %v2618 = vpack.c.b16 %v2506, %v2505
        %v2619 = vpack.c.b16 %v2508, %v2507
        %v2620 = vpack.c.b16 %v2510, %v2509
        %v2621 = vpack.c.b16 %v2512, %v2511
        %v2622 = vpack.c.b16 %v2514, %v2513
        %v2623 = vpack.c.b16 %v2516, %v2515
        %v2624 = vpack.c.b16 %v2518, %v2517
        %v2625 = vpack.c.b16 %v2520, %v2519
        %v2626 = vpack.c.b16 %v2522, %v2521
        %v2627 = vpack.c.b16 %v2524, %v2523
        %v2628 = vpack.c.b16 %v2526, %v2525
        %v2629 = vpack.c.b16 %v2528, %v2527
        %v2630 = vpack.c.b16 %v2530, %v2529
        %v2631 = vpack.c.b16 %v2532, %v2531
        %v2632 = vpack.c.b16 %v2534, %v2533
        %v2633 = vpack.c.b16 %v2536, %v2535
        %v2634 = vpack.c.b16 %v2538, %v2537
        %v2635 = vpack.c.b16 %v2540, %v2539
        %v2636 = vpack.c.b16 %v2542, %v2541
        %v2637 = vpack.c.b16 %v2544, %v2543
        %v2638 = vpack.c.b16 %v2546, %v2545
        %v2639 = vpack.c.b16 %v2548, %v2547
        %v2640 = vpack.c.b16 %v2550, %v2549
        %v2641 = vpack.c.b16 %v2552, %v2551
        %v2642 = vpack.c.b16 %v2554, %v2553
        %v2643 = vpack.c.b16 %v2556, %v2555
        %v2644 = vpack.c.b16 %v2558, %v2557
        %v2645 = vpack.c.b16 %v2560, %v2559
        %v2646 = vpack.c.b16 %v2562, %v2561
        %v2647 = vpack.c.b16 %v2564, %v2563
        %v2648 = vpack.c.b16 %v2566, %v2565
        %v2649 = vpack.c.b16 %v2568, %v2567
        %v2650 = vpack.c.b16 %v2570, %v2569
        %v2651 = vpack.c.b16 %v2572, %v2571
        %v2652 = vpack.c.b16 %v2574, %v2573
        %v2653 = vpack.c.b16 %v2576, %v2575
        %v2654 = vpack.c.b16 %v2578, %v2577
        %v2655 = vpack.c.b16 %v2580, %v2579
        %v2656 = vpack.c.b16 %v2582, %v2581
        %v2657 = vpack.c.b16 %v2584, %v2583
        %v2658 = vpack.c.b16 %v2586, %v2585
        %v2659 = vpack.c.b16 %v2588, %v2587
        %v2660 = vpack.c.b16 %v2590, %v2589
        %v2661 = vpack.c.b16 %v2592, %v2591
        %v2662 = vpack.c.b16 %v2594, %v2593
        %v2663 = vpack.c.b16 %v2596, %v2595
        %v2664 = vpack.c.b16 %v2598, %v2597
        %v2665 = vpack.c.b16 %v2600, %v2599
        %v2666 = vpack.c.b16 %v2602, %v2601
        %2731 = vst [vmem:[%s312] sm:$0xff] %v2603
        %2732 = vst [vmem:[%s312 + $0x8] sm:$0xff] %v2604
        %2733 = vst [vmem:[%s312 + $0x10] sm:$0xff] %v2605
        %2734 = vst [vmem:[%s312 + $0x18] sm:$0xff] %v2606
        %2735 = vst [vmem:[%s312 + $0x20] sm:$0xff] %v2607
        %2736 = vst [vmem:[%s312 + $0x28] sm:$0xff] %v2608
        %2737 = vst [vmem:[%s312 + $0x30] sm:$0xff] %v2609
        %2738 = vst [vmem:[%s312 + $0x38] sm:$0xff] %v2610
        %2739 = vst [vmem:[%s312 + $0x40] sm:$0xff] %v2611
        %2740 = vst [vmem:[%s312 + $0x48] sm:$0xff] %v2612
        %2741 = vst [vmem:[%s312 + $0x50] sm:$0xff] %v2613
        %2742 = vst [vmem:[%s312 + $0x58] sm:$0xff] %v2614
        %2743 = vst [vmem:[%s312 + $0x60] sm:$0xff] %v2615
        %2744 = vst [vmem:[%s312 + $0x68] sm:$0xff] %v2616
        %2745 = vst [vmem:[%s312 + $0x70] sm:$0xff] %v2617
        %2746 = vst [vmem:[%s312 + $0x78] sm:$0xff] %v2618
        %2747 = vst [vmem:[%s312 + $0x80] sm:$0xff] %v2619
        %2748 = vst [vmem:[%s312 + $0x88] sm:$0xff] %v2620
        %2749 = vst [vmem:[%s312 + $0x90] sm:$0xff] %v2621
        %2750 = vst [vmem:[%s312 + $0x98] sm:$0xff] %v2622
        %2751 = vst [vmem:[%s312 + $0xa0] sm:$0xff] %v2623
        %2752 = vst [vmem:[%s312 + $0xa8] sm:$0xff] %v2624
        %2753 = vst [vmem:[%s312 + $0xb0] sm:$0xff] %v2625
        %2754 = vst [vmem:[%s312 + $0xb8] sm:$0xff] %v2626
        %2755 = vst [vmem:[%s312 + $0xc0] sm:$0xff] %v2627
        %2756 = vst [vmem:[%s312 + $0xc8] sm:$0xff] %v2628
        %2757 = vst [vmem:[%s312 + $0xd0] sm:$0xff] %v2629
        %2758 = vst [vmem:[%s312 + $0xd8] sm:$0xff] %v2630
        %2759 = vst [vmem:[%s312 + $0xe0] sm:$0xff] %v2631
        %2760 = vst [vmem:[%s312 + $0xe8] sm:$0xff] %v2632
        %2761 = vst [vmem:[%s312 + $0xf0] sm:$0xff] %v2633
        %2762 = vst [vmem:[%s312 + $0xf8] sm:$0xff] %v2634
        %2763 = vst [vmem:[%s312 + $0x100] sm:$0xff] %v2635
        %2764 = vst [vmem:[%s312 + $0x108] sm:$0xff] %v2636
        %2765 = vst [vmem:[%s312 + $0x110] sm:$0xff] %v2637
        %2766 = vst [vmem:[%s312 + $0x118] sm:$0xff] %v2638
        %2767 = vst [vmem:[%s312 + $0x120] sm:$0xff] %v2639
        %2768 = vst [vmem:[%s312 + $0x128] sm:$0xff] %v2640
        %2769 = vst [vmem:[%s312 + $0x130] sm:$0xff] %v2641
        %2770 = vst [vmem:[%s312 + $0x138] sm:$0xff] %v2642
        %2771 = vst [vmem:[%s312 + $0x140] sm:$0xff] %v2643
        %2772 = vst [vmem:[%s312 + $0x148] sm:$0xff] %v2644
        %2773 = vst [vmem:[%s312 + $0x150] sm:$0xff] %v2645
        %2774 = vst [vmem:[%s312 + $0x158] sm:$0xff] %v2646
        %2775 = vst [vmem:[%s312 + $0x160] sm:$0xff] %v2647
        %2776 = vst [vmem:[%s312 + $0x168] sm:$0xff] %v2648
        %2777 = vst [vmem:[%s312 + $0x170] sm:$0xff] %v2649
        %2778 = vst [vmem:[%s312 + $0x178] sm:$0xff] %v2650
        %2779 = vst [vmem:[%s312 + $0x180] sm:$0xff] %v2651
        %2780 = vst [vmem:[%s312 + $0x188] sm:$0xff] %v2652
        %2781 = vst [vmem:[%s312 + $0x190] sm:$0xff] %v2653
        %2782 = vst [vmem:[%s312 + $0x198] sm:$0xff] %v2654
        %2783 = vst [vmem:[%s312 + $0x1a0] sm:$0xff] %v2655
        %2784 = vst [vmem:[%s312 + $0x1a8] sm:$0xff] %v2656
        %2785 = vst [vmem:[%s312 + $0x1b0] sm:$0xff] %v2657
        %2786 = vst [vmem:[%s312 + $0x1b8] sm:$0xff] %v2658
        %2787 = vst [vmem:[%s312 + $0x1c0] sm:$0xff] %v2659
        %2788 = vst [vmem:[%s312 + $0x1c8] sm:$0xff] %v2660
        %2789 = vst [vmem:[%s312 + $0x1d0] sm:$0xff] %v2661
        %2790 = vst [vmem:[%s312 + $0x1d8] sm:$0xff] %v2662
        %2791 = vst [vmem:[%s312 + $0x1e0] sm:$0xff] %v2663
        %2792 = vst [vmem:[%s312 + $0x1e8] sm:$0xff] %v2664
        %2793 = vst [vmem:[%s312 + $0x1f0] sm:$0xff] %v2665
        %2794 = vst [vmem:[%s312 + $0x1f8] sm:$0xff] %v2666
        %s2795 = sand.u32 %s149, 1
        %s2796 = scalar_lea.sflag [#allocation4], %s2795
        %s2797 = sand.u32 %s149, 1
        %s2798 = smul.addr %s2797, 512
        %s2799 = scalar_lea.vmem [#allocation10], %s2798
        // Predicated region
        $region57: #{qconcat.1} parent=39 // pred_check
          %p2800 = pneg %p159
        $region58: #{qconcat.1} parent=39 // pred_check_branch
          %2802 = sbr.rel (%p2800) target = $region60
        $region59: #{qconcat.1} parent=39 // pred_region
          %s2803 = smul.u32 64, %s26
          %s2805 = ssub.s32 8192, 8192
          %2806 = vsyncadd %s2796, %s2805
          %s2807 = smul.addr %s2803, 2
          %s2808 = smul.addr %s2807, 64
          %s2809 = scalar_lea.hbm %s5, %s2808
          %s2810 = sshll.u32 %s2799, 4
          %s2811 = int_to_ptr.vmem [resolvable:$true] %s2810
          %2816 = dma.vmem_to_hbm [thread:$0]  %s2811, 8192, %s2809, %s2796, 128, 128, 8
        $region60: #{qconcat.1} parent=39 // pred_fallthru
          _
      $region40: #{qconcat.1} parent=5 // pred_fallthru
        _
      %p2817 = scmp.le.s32.totalorder 2, %s21
      // Predicated region
      $region61: #{qconcat.1} parent=5 // pred_check
        %p2818 = pneg %p2817
      $region62: #{qconcat.1} parent=5 // pred_check_branch
        %2820 = sbr.rel (%p2818) target = $region64
      $region63: #{qconcat.1} parent=5 // pred_region
        %s2821 = ssub.s32 %s21, 2
        // Predicated region
        $region65: #{qconcat.1} parent=63 // pred_check
          %p2822 = pneg %p165
        $region66: #{qconcat.1} parent=63 // pred_check_branch
          %2824 = sbr.rel (%p2822) target = $region68
        $region67: #{qconcat.1} parent=63 // pred_region
          %s2825 = sand.u32 %s150, 1
          %s2826 = scalar_lea.sflag [#allocation4], %s2825
          %s2827 = sand.u32 %s150, 1
          %s2828 = smul.addr %s2827, 512
          %s2829 = scalar_lea.vmem [#allocation10], %s2828
          %2830 = dma.done %s2826, 8192
        $region68: #{qconcat.1} parent=63 // pred_fallthru
          _
      $region64: #{qconcat.1} parent=5 // pred_fallthru
        _
    $region6: #{qconcat.1} parent=1 // loop_footer
      %s25 = sadd.s32 1, %s21
    $region7: #{qconcat.1} parent=1 // loop_footer_branch
      %20 = sbr.rel target = $region3
    $region8: #{qconcat.1} parent=1 // loop_exit
      _
    %2831 = vsyncpa [#allocation3], 1
    %s2832 = scalar_lea.sflag [#allocation3], 1
    %2833 = vsyncpa %s2832, 1
    %2834 = vsyncpa [#allocation6], 1
    %s2835 = scalar_lea.sflag [#allocation6], 1
    %2836 = vsyncpa %s2835, 1
    %2837 = vsyncpa [#allocation9], 1
    %2838 = vsyncpa [#allocation4], 1
    %s2839 = scalar_lea.sflag [#allocation4], 1
    %2840 = vsyncpa %s2839, 1

</llo_original>
